<compile_context>
chip_gen: v7x
topology: tpu7x:2x2x1
jax: 0.10.0
libtpu: 0.0.40
codegen_flags: <defaults>
</compile_context>

<pallas_src>
import jax
import jax.numpy as jnp
from jax import lax
from jax.experimental import pallas as pl
from jax.experimental.pallas import tpu as pltpu

HIDDEN_DIM = 32
INPUT_DIM = 1
NUM_LAYERS = 2
OUTPUT_DIM = 1


def gru_kernel(x_ref,
               w_ih0_ref, b_i0_ref,          # layer-0 input proj (Din=1)
               w_hh_ref, b_h_ref,            # fused block-diag hidden proj (both layers)
               w_ih1_ref, b_i1_ref,          # layer-1 input proj
               w_fc_ref, b_fc_ref,           # fc head
               out_ref):
    T, B, _ = x_ref.shape
    H = HIDDEN_DIM
    H2 = 2 * H
    H3 = 3 * H

    # Tiny weights: load once, they live in vregs/VMEM for the whole recurrence.
    w_ih0 = w_ih0_ref[...]        # (1, 3H)
    b_i0 = b_i0_ref[...]          # (1, 3H)
    w_hh = w_hh_ref[...]          # (2H, 6H)  block-diag [w_hh0 | 0 ; 0 | w_hh1]
    b_h = b_h_ref[...]            # (1, 6H)   [b_hh0 | b_hh1]
    w_ih1 = w_ih1_ref[...]        # (H, 3H)
    b_i1 = b_i1_ref[...]          # (1, 3H)

    def step(t, carry):
        h1, h2 = carry
        x_t = x_ref[t]                                   # (B, 1)

        # Layer-0 input projection: Din == 1  ->  broadcast outer product (VPU),
        # independent of the carry, so it is off the serial chain.
        gi0 = x_t * w_ih0 + b_i0                         # (B, 3H)

        # Both hidden-state projections depend only on the carry: one fused MXU op.
        hh = jnp.concatenate([h1, h2], axis=-1)          # (B, 2H)
        gh = jnp.dot(hh, w_hh, preferred_element_type=jnp.float32) + b_h  # (B, 6H)
        gh0 = gh[:, :H3]
        gh1 = gh[:, H3:]

        # ---- layer 0 gates (PyTorch order [r|z|n]) ----
        rz0 = jax.nn.sigmoid(gi0[:, :H2] + gh0[:, :H2])  # one sigmoid on the r|z slab
        r0, z0 = rz0[:, :H], rz0[:, H:]
        n0 = jnp.tanh(gi0[:, H2:] + r0 * gh0[:, H2:])    # r * (W_hn h + b_hn)
        h1n = (1.0 - z0) * n0 + z0 * h1

        # ---- layer 1: only gi1 is serially dependent on h1n ----
        gi1 = jnp.dot(h1n, w_ih1, preferred_element_type=jnp.float32) + b_i1
        rz1 = jax.nn.sigmoid(gi1[:, :H2] + gh1[:, :H2])
        r1, z1 = rz1[:, :H], rz1[:, H:]
        n1 = jnp.tanh(gi1[:, H2:] + r1 * gh1[:, H2:])
        h2n = (1.0 - z1) * n1 + z1 * h2
        return (h1n, h2n)

    h0 = jnp.zeros((B, H), jnp.float32)                  # matches torch.zeros h0
    # T is static; full unroll gives the scheduler cross-step visibility.
    _, h2_last = lax.fori_loop(0, T, step, (h0, h0), unroll=True)

    # fc(out[:, -1, :]): (B,32)x(32,1) done as VPU mul + lane reduce (no MXU tail).
    out_ref[...] = (jnp.sum(h2_last * w_fc_ref[...], axis=-1, keepdims=True)
                    + b_fc_ref[...])


def init_params(key, input_dim=INPUT_DIM, hidden_dim=HIDDEN_DIM,
                output_dim=OUTPUT_DIM):
    """Deterministic init matching PyTorch param shapes (uniform +/- 1/sqrt(H))."""
    k = 1.0 / jnp.sqrt(jnp.float32(hidden_dim))
    keys = jax.random.split(key, 14)

    def u(kk, shape):
        return jax.random.uniform(kk, shape, jnp.float32, -k, k)

    return {
        # layer 0
        "w_ih_l0": u(keys[0], (3 * hidden_dim, input_dim)),
        "w_hh_l0": u(keys[1], (3 * hidden_dim, hidden_dim)),
        "b_ih_l0": u(keys[2], (3 * hidden_dim,)),
        "b_hh_l0": u(keys[3], (3 * hidden_dim,)),
        # layer 1
        "w_ih_l1": u(keys[4], (3 * hidden_dim, hidden_dim)),
        "w_hh_l1": u(keys[5], (3 * hidden_dim, hidden_dim)),
        "b_ih_l1": u(keys[6], (3 * hidden_dim,)),
        "b_hh_l1": u(keys[7], (3 * hidden_dim,)),
        # fc head
        "w_fc": u(keys[8], (output_dim, hidden_dim)),
        "b_fc": u(keys[9], (output_dim,)),
    }


def gru_forward(x, params):
    """x: (B, T, input_dim) batch_first, like the PyTorch module."""
    B, T, Din = x.shape
    H = HIDDEN_DIM
    x_tm = jnp.transpose(x.astype(jnp.float32), (1, 0, 2))    # (T, B, Din)

    # Block-diagonal fused hidden-projection weight: [h1|h2] @ W = [gh0|gh1].
    w_hh0_t = params["w_hh_l0"].T                              # (H, 3H)
    w_hh1_t = params["w_hh_l1"].T                              # (H, 3H)
    zeros = jnp.zeros((H, 3 * H), jnp.float32)
    w_hh_fused = jnp.concatenate(
        [jnp.concatenate([w_hh0_t, zeros], axis=1),
         jnp.concatenate([zeros, w_hh1_t], axis=1)], axis=0)   # (2H, 6H)
    b_h_fused = jnp.concatenate(
        [params["b_hh_l0"], params["b_hh_l1"]]).reshape(1, 6 * H)

    kernel_args = (
        x_tm,                                                  # (T, B, 1)
        params["w_ih_l0"].T,                                   # (1, 3H)
        params["b_ih_l0"].reshape(1, 3 * H),
        w_hh_fused,                                            # (2H, 6H)
        b_h_fused,                                             # (1, 6H)
        params["w_ih_l1"].T,                                   # (H, 3H)
        params["b_ih_l1"].reshape(1, 3 * H),
        params["w_fc"],                                        # (1, H) row for VPU reduce
        params["b_fc"].reshape(1, OUTPUT_DIM),
    )

    vmem_spec = pl.BlockSpec(memory_space=pltpu.MemorySpace.VMEM)
    out = pl.pallas_call(
        gru_kernel,
        out_shape=jax.ShapeDtypeStruct((B, OUTPUT_DIM), jnp.float32),
        in_specs=[vmem_spec for _ in range(len(kernel_args))],
        out_specs=vmem_spec,
    )(*kernel_args)
    return out


def gru_reference(x, params):
    """Pure-JAX reference mirroring torch.nn.GRU(batch_first=True) + Linear."""
    B, T, _ = x.shape
    H = HIDDEN_DIM

    def cell(x_t, h_prev, w_ih, w_hh, b_ih, b_hh):
        gi = x_t @ w_ih.T + b_ih
        gh = h_prev @ w_hh.T + b_hh
        i_r, i_z, i_n = gi[:, :H], gi[:, H:2 * H], gi[:, 2 * H:]
        h_r, h_z, h_n = gh[:, :H], gh[:, H:2 * H], gh[:, 2 * H:]
        r = jax.nn.sigmoid(i_r + h_r)
        z = jax.nn.sigmoid(i_z + h_z)
        n = jnp.tanh(i_n + r * h_n)
        return (1.0 - z) * n + z * h_prev

    h1 = jnp.zeros((B, H), jnp.float32)
    h2 = jnp.zeros((B, H), jnp.float32)
    for t in range(T):
        x_t = x[:, t, :].astype(jnp.float32)
        h1 = cell(x_t, h1, params["w_ih_l0"], params["w_hh_l0"],
                  params["b_ih_l0"], params["b_hh_l0"])
        h2 = cell(h1, h2, params["w_ih_l1"], params["w_hh_l1"],
                  params["b_ih_l1"], params["b_hh_l1"])
    return h2 @ params["w_fc"].T + params["b_fc"]


if __name__ == "__main__":
    key = jax.random.PRNGKey(0)
    pkey, xkey = jax.random.split(key)

    params = init_params(pkey)

    B, T = 2, 8
    x = jax.random.normal(xkey, (B, T, INPUT_DIM), jnp.float32)

    out = jax.block_until_ready(gru_forward(x, params))
    ref = jax.block_until_ready(gru_reference(x, params))

    assert out.shape == (B, OUTPUT_DIM), out.shape
    assert jnp.allclose(out, ref, atol=1e-5, rtol=1e-5), (out, ref)
    print("KERNEL_OK")
</pallas_src>

<mosaic_0001>
module attributes {stable_mosaic.version = 11 : i64} {
  func.func @gru_kernel(%arg0: memref<8x2x1xf32, #tpu.memory_space<vmem>>, %arg1: memref<1x96xf32, #tpu.memory_space<vmem>>, %arg2: memref<1x96xf32, #tpu.memory_space<vmem>>, %arg3: memref<64x192xf32, #tpu.memory_space<vmem>>, %arg4: memref<1x192xf32, #tpu.memory_space<vmem>>, %arg5: memref<32x96xf32, #tpu.memory_space<vmem>>, %arg6: memref<1x96xf32, #tpu.memory_space<vmem>>, %arg7: memref<1x32xf32, #tpu.memory_space<vmem>>, %arg8: memref<1x1xf32, #tpu.memory_space<vmem>>, %arg9: memref<2x1xf32, #tpu.memory_space<vmem>>) attributes {dimension_semantics = [], scalar_prefetch = 0 : i64, scratch_operands = 0 : i64, tpu.core_type = #tpu.core_type<tc>} {
    %c0 = arith.constant 0 : index
    %c0_0 = arith.constant 0 : index
    %0 = vector.load %arg1[%c0, %c0_0] : memref<1x96xf32, #tpu.memory_space<vmem>>, vector<1x96xf32>
    %c0_1 = arith.constant 0 : index
    %c0_2 = arith.constant 0 : index
    %1 = vector.load %arg2[%c0_1, %c0_2] : memref<1x96xf32, #tpu.memory_space<vmem>>, vector<1x96xf32>
    %c0_3 = arith.constant 0 : index
    %c0_4 = arith.constant 0 : index
    %2 = vector.load %arg3[%c0_3, %c0_4] : memref<64x192xf32, #tpu.memory_space<vmem>>, vector<64x192xf32>
    %c0_5 = arith.constant 0 : index
    %c0_6 = arith.constant 0 : index
    %3 = vector.load %arg4[%c0_5, %c0_6] : memref<1x192xf32, #tpu.memory_space<vmem>>, vector<1x192xf32>
    %c0_7 = arith.constant 0 : index
    %c0_8 = arith.constant 0 : index
    %4 = vector.load %arg5[%c0_7, %c0_8] : memref<32x96xf32, #tpu.memory_space<vmem>>, vector<32x96xf32>
    %c0_9 = arith.constant 0 : index
    %c0_10 = arith.constant 0 : index
    %5 = vector.load %arg6[%c0_9, %c0_10] : memref<1x96xf32, #tpu.memory_space<vmem>>, vector<1x96xf32>
    %cst = arith.constant 0.000000e+00 : f32
    %6 = vector.broadcast %cst : f32 to vector<2x32xf32>
    %c0_i32 = arith.constant 0 : i32
    %7 = arith.index_cast %c0_i32 : i32 to index
    %c0_11 = arith.constant 0 : index
    %c0_12 = arith.constant 0 : index
    %8 = vector.load %arg0[%7, %c0_11, %c0_12] : memref<8x2x1xf32, #tpu.memory_space<vmem>>, vector<1x2x1xf32>
    %9 = vector.shape_cast %8 : vector<1x2x1xf32> to vector<2x1xf32>
    %10 = vector.broadcast %9 : vector<2x1xf32> to vector<2x96xf32>
    %11 = vector.broadcast %0 : vector<1x96xf32> to vector<2x96xf32>
    %12 = arith.mulf %10, %11 : vector<2x96xf32>
    %13 = vector.broadcast %1 : vector<1x96xf32> to vector<2x96xf32>
    %14 = arith.addf %12, %13 : vector<2x96xf32>
    %15 = tpu.concatenate %6, %6 in 1 : vector<2x32xf32>, vector<2x32xf32> -> vector<2x64xf32>
    %cst_13 = arith.constant dense<0.000000e+00> : vector<2x192xf32>
    %16 = tpu.matmul %15, %2, %cst_13 {dimension_numbers = #tpu.dot_dimension_numbers<[1], [0], [0], [1], [0, 0, 1, 1], [], []>} : vector<2x64xf32>, vector<64x192xf32>, vector<2x192xf32> -> vector<2x192xf32>
    %17 = vector.broadcast %3 : vector<1x192xf32> to vector<2x192xf32>
    %18 = arith.addf %16, %17 : vector<2x192xf32>
    %19 = vector.extract_strided_slice %18 {offsets = [0, 0], sizes = [2, 96], strides = [1, 1]} : vector<2x192xf32> to vector<2x96xf32>
    %20 = vector.extract_strided_slice %18 {offsets = [0, 96], sizes = [2, 96], strides = [1, 1]} : vector<2x192xf32> to vector<2x96xf32>
    %21 = vector.extract_strided_slice %14 {offsets = [0, 0], sizes = [2, 64], strides = [1, 1]} : vector<2x96xf32> to vector<2x64xf32>
    %22 = vector.extract_strided_slice %19 {offsets = [0, 0], sizes = [2, 64], strides = [1, 1]} : vector<2x96xf32> to vector<2x64xf32>
    %23 = arith.addf %21, %22 : vector<2x64xf32>
    %24 = arith.negf %23 : vector<2x64xf32>
    %25 = math.exp %24 : vector<2x64xf32>
    %cst_14 = arith.constant 1.000000e+00 : f32
    %26 = vector.broadcast %cst_14 : f32 to vector<2x64xf32>
    %27 = arith.addf %26, %25 : vector<2x64xf32>
    %28 = arith.divf %26, %27 : vector<2x64xf32>
    %29 = vector.extract_strided_slice %28 {offsets = [0, 0], sizes = [2, 32], strides = [1, 1]} : vector<2x64xf32> to vector<2x32xf32>
    %30 = vector.extract_strided_slice %28 {offsets = [0, 32], sizes = [2, 32], strides = [1, 1]} : vector<2x64xf32> to vector<2x32xf32>
    %31 = vector.extract_strided_slice %14 {offsets = [0, 64], sizes = [2, 32], strides = [1, 1]} : vector<2x96xf32> to vector<2x32xf32>
    %32 = vector.extract_strided_slice %19 {offsets = [0, 64], sizes = [2, 32], strides = [1, 1]} : vector<2x96xf32> to vector<2x32xf32>
    %33 = arith.mulf %29, %32 : vector<2x32xf32>
    %34 = arith.addf %31, %33 : vector<2x32xf32>
    %35 = math.tanh %34 : vector<2x32xf32>
    %cst_15 = arith.constant 1.000000e+00 : f32
    %36 = vector.broadcast %cst_15 : f32 to vector<2x32xf32>
    %37 = arith.subf %36, %30 : vector<2x32xf32>
    %38 = arith.mulf %37, %35 : vector<2x32xf32>
    %39 = arith.mulf %30, %6 : vector<2x32xf32>
    %40 = arith.addf %38, %39 : vector<2x32xf32>
    %cst_16 = arith.constant dense<0.000000e+00> : vector<2x96xf32>
    %41 = tpu.matmul %40, %4, %cst_16 {dimension_numbers = #tpu.dot_dimension_numbers<[1], [0], [0], [1], [0, 0, 1, 1], [], []>} : vector<2x32xf32>, vector<32x96xf32>, vector<2x96xf32> -> vector<2x96xf32>
    %42 = vector.broadcast %5 : vector<1x96xf32> to vector<2x96xf32>
    %43 = arith.addf %41, %42 : vector<2x96xf32>
    %44 = vector.extract_strided_slice %43 {offsets = [0, 0], sizes = [2, 64], strides = [1, 1]} : vector<2x96xf32> to vector<2x64xf32>
    %45 = vector.extract_strided_slice %20 {offsets = [0, 0], sizes = [2, 64], strides = [1, 1]} : vector<2x96xf32> to vector<2x64xf32>
    %46 = arith.addf %44, %45 : vector<2x64xf32>
    %47 = arith.negf %46 : vector<2x64xf32>
    %48 = math.exp %47 : vector<2x64xf32>
    %cst_17 = arith.constant 1.000000e+00 : f32
    %49 = vector.broadcast %cst_17 : f32 to vector<2x64xf32>
    %50 = arith.addf %49, %48 : vector<2x64xf32>
    %51 = arith.divf %49, %50 : vector<2x64xf32>
    %52 = vector.extract_strided_slice %51 {offsets = [0, 0], sizes = [2, 32], strides = [1, 1]} : vector<2x64xf32> to vector<2x32xf32>
    %53 = vector.extract_strided_slice %51 {offsets = [0, 32], sizes = [2, 32], strides = [1, 1]} : vector<2x64xf32> to vector<2x32xf32>
    %54 = vector.extract_strided_slice %43 {offsets = [0, 64], sizes = [2, 32], strides = [1, 1]} : vector<2x96xf32> to vector<2x32xf32>
    %55 = vector.extract_strided_slice %20 {offsets = [0, 64], sizes = [2, 32], strides = [1, 1]} : vector<2x96xf32> to vector<2x32xf32>
    %56 = arith.mulf %52, %55 : vector<2x32xf32>
    %57 = arith.addf %54, %56 : vector<2x32xf32>
    %58 = math.tanh %57 : vector<2x32xf32>
    %cst_18 = arith.constant 1.000000e+00 : f32
    %59 = vector.broadcast %cst_18 : f32 to vector<2x32xf32>
    %60 = arith.subf %59, %53 : vector<2x32xf32>
    %61 = arith.mulf %60, %58 : vector<2x32xf32>
    %62 = arith.mulf %53, %6 : vector<2x32xf32>
    %63 = arith.addf %61, %62 : vector<2x32xf32>
    %c1_i32 = arith.constant 1 : i32
    %64 = arith.index_cast %c1_i32 : i32 to index
    %c0_19 = arith.constant 0 : index
    %c0_20 = arith.constant 0 : index
    %65 = vector.load %arg0[%64, %c0_19, %c0_20] : memref<8x2x1xf32, #tpu.memory_space<vmem>>, vector<1x2x1xf32>
    %66 = vector.shape_cast %65 : vector<1x2x1xf32> to vector<2x1xf32>
    %67 = vector.broadcast %66 : vector<2x1xf32> to vector<2x96xf32>
    %68 = vector.broadcast %0 : vector<1x96xf32> to vector<2x96xf32>
    %69 = arith.mulf %67, %68 : vector<2x96xf32>
    %70 = vector.broadcast %1 : vector<1x96xf32> to vector<2x96xf32>
    %71 = arith.addf %69, %70 : vector<2x96xf32>
    %72 = tpu.concatenate %40, %63 in 1 : vector<2x32xf32>, vector<2x32xf32> -> vector<2x64xf32>
    %cst_21 = arith.constant dense<0.000000e+00> : vector<2x192xf32>
    %73 = tpu.matmul %72, %2, %cst_21 {dimension_numbers = #tpu.dot_dimension_numbers<[1], [0], [0], [1], [0, 0, 1, 1], [], []>} : vector<2x64xf32>, vector<64x192xf32>, vector<2x192xf32> -> vector<2x192xf32>
    %74 = vector.broadcast %3 : vector<1x192xf32> to vector<2x192xf32>
    %75 = arith.addf %73, %74 : vector<2x192xf32>
    %76 = vector.extract_strided_slice %75 {offsets = [0, 0], sizes = [2, 96], strides = [1, 1]} : vector<2x192xf32> to vector<2x96xf32>
    %77 = vector.extract_strided_slice %75 {offsets = [0, 96], sizes = [2, 96], strides = [1, 1]} : vector<2x192xf32> to vector<2x96xf32>
    %78 = vector.extract_strided_slice %71 {offsets = [0, 0], sizes = [2, 64], strides = [1, 1]} : vector<2x96xf32> to vector<2x64xf32>
    %79 = vector.extract_strided_slice %76 {offsets = [0, 0], sizes = [2, 64], strides = [1, 1]} : vector<2x96xf32> to vector<2x64xf32>
    %80 = arith.addf %78, %79 : vector<2x64xf32>
    %81 = arith.negf %80 : vector<2x64xf32>
    %82 = math.exp %81 : vector<2x64xf32>
    %cst_22 = arith.constant 1.000000e+00 : f32
    %83 = vector.broadcast %cst_22 : f32 to vector<2x64xf32>
    %84 = arith.addf %83, %82 : vector<2x64xf32>
    %85 = arith.divf %83, %84 : vector<2x64xf32>
    %86 = vector.extract_strided_slice %85 {offsets = [0, 0], sizes = [2, 32], strides = [1, 1]} : vector<2x64xf32> to vector<2x32xf32>
    %87 = vector.extract_strided_slice %85 {offsets = [0, 32], sizes = [2, 32], strides = [1, 1]} : vector<2x64xf32> to vector<2x32xf32>
    %88 = vector.extract_strided_slice %71 {offsets = [0, 64], sizes = [2, 32], strides = [1, 1]} : vector<2x96xf32> to vector<2x32xf32>
    %89 = vector.extract_strided_slice %76 {offsets = [0, 64], sizes = [2, 32], strides = [1, 1]} : vector<2x96xf32> to vector<2x32xf32>
    %90 = arith.mulf %86, %89 : vector<2x32xf32>
    %91 = arith.addf %88, %90 : vector<2x32xf32>
    %92 = math.tanh %91 : vector<2x32xf32>
    %cst_23 = arith.constant 1.000000e+00 : f32
    %93 = vector.broadcast %cst_23 : f32 to vector<2x32xf32>
    %94 = arith.subf %93, %87 : vector<2x32xf32>
    %95 = arith.mulf %94, %92 : vector<2x32xf32>
    %96 = arith.mulf %87, %40 : vector<2x32xf32>
    %97 = arith.addf %95, %96 : vector<2x32xf32>
    %cst_24 = arith.constant dense<0.000000e+00> : vector<2x96xf32>
    %98 = tpu.matmul %97, %4, %cst_24 {dimension_numbers = #tpu.dot_dimension_numbers<[1], [0], [0], [1], [0, 0, 1, 1], [], []>} : vector<2x32xf32>, vector<32x96xf32>, vector<2x96xf32> -> vector<2x96xf32>
    %99 = vector.broadcast %5 : vector<1x96xf32> to vector<2x96xf32>
    %100 = arith.addf %98, %99 : vector<2x96xf32>
    %101 = vector.extract_strided_slice %100 {offsets = [0, 0], sizes = [2, 64], strides = [1, 1]} : vector<2x96xf32> to vector<2x64xf32>
    %102 = vector.extract_strided_slice %77 {offsets = [0, 0], sizes = [2, 64], strides = [1, 1]} : vector<2x96xf32> to vector<2x64xf32>
    %103 = arith.addf %101, %102 : vector<2x64xf32>
    %104 = arith.negf %103 : vector<2x64xf32>
    %105 = math.exp %104 : vector<2x64xf32>
    %cst_25 = arith.constant 1.000000e+00 : f32
    %106 = vector.broadcast %cst_25 : f32 to vector<2x64xf32>
    %107 = arith.addf %106, %105 : vector<2x64xf32>
    %108 = arith.divf %106, %107 : vector<2x64xf32>
    %109 = vector.extract_strided_slice %108 {offsets = [0, 0], sizes = [2, 32], strides = [1, 1]} : vector<2x64xf32> to vector<2x32xf32>
    %110 = vector.extract_strided_slice %108 {offsets = [0, 32], sizes = [2, 32], strides = [1, 1]} : vector<2x64xf32> to vector<2x32xf32>
    %111 = vector.extract_strided_slice %100 {offsets = [0, 64], sizes = [2, 32], strides = [1, 1]} : vector<2x96xf32> to vector<2x32xf32>
    %112 = vector.extract_strided_slice %77 {offsets = [0, 64], sizes = [2, 32], strides = [1, 1]} : vector<2x96xf32> to vector<2x32xf32>
    %113 = arith.mulf %109, %112 : vector<2x32xf32>
    %114 = arith.addf %111, %113 : vector<2x32xf32>
    %115 = math.tanh %114 : vector<2x32xf32>
    %cst_26 = arith.constant 1.000000e+00 : f32
    %116 = vector.broadcast %cst_26 : f32 to vector<2x32xf32>
    %117 = arith.subf %116, %110 : vector<2x32xf32>
    %118 = arith.mulf %117, %115 : vector<2x32xf32>
    %119 = arith.mulf %110, %63 : vector<2x32xf32>
    %120 = arith.addf %118, %119 : vector<2x32xf32>
    %c2_i32 = arith.constant 2 : i32
    %121 = arith.index_cast %c2_i32 : i32 to index
    %c0_27 = arith.constant 0 : index
    %c0_28 = arith.constant 0 : index
    %122 = vector.load %arg0[%121, %c0_27, %c0_28] : memref<8x2x1xf32, #tpu.memory_space<vmem>>, vector<1x2x1xf32>
    %123 = vector.shape_cast %122 : vector<1x2x1xf32> to vector<2x1xf32>
    %124 = vector.broadcast %123 : vector<2x1xf32> to vector<2x96xf32>
    %125 = vector.broadcast %0 : vector<1x96xf32> to vector<2x96xf32>
    %126 = arith.mulf %124, %125 : vector<2x96xf32>
    %127 = vector.broadcast %1 : vector<1x96xf32> to vector<2x96xf32>
    %128 = arith.addf %126, %127 : vector<2x96xf32>
    %129 = tpu.concatenate %97, %120 in 1 : vector<2x32xf32>, vector<2x32xf32> -> vector<2x64xf32>
    %cst_29 = arith.constant dense<0.000000e+00> : vector<2x192xf32>
    %130 = tpu.matmul %129, %2, %cst_29 {dimension_numbers = #tpu.dot_dimension_numbers<[1], [0], [0], [1], [0, 0, 1, 1], [], []>} : vector<2x64xf32>, vector<64x192xf32>, vector<2x192xf32> -> vector<2x192xf32>
    %131 = vector.broadcast %3 : vector<1x192xf32> to vector<2x192xf32>
    %132 = arith.addf %130, %131 : vector<2x192xf32>
    %133 = vector.extract_strided_slice %132 {offsets = [0, 0], sizes = [2, 96], strides = [1, 1]} : vector<2x192xf32> to vector<2x96xf32>
    %134 = vector.extract_strided_slice %132 {offsets = [0, 96], sizes = [2, 96], strides = [1, 1]} : vector<2x192xf32> to vector<2x96xf32>
    %135 = vector.extract_strided_slice %128 {offsets = [0, 0], sizes = [2, 64], strides = [1, 1]} : vector<2x96xf32> to vector<2x64xf32>
    %136 = vector.extract_strided_slice %133 {offsets = [0, 0], sizes = [2, 64], strides = [1, 1]} : vector<2x96xf32> to vector<2x64xf32>
    %137 = arith.addf %135, %136 : vector<2x64xf32>
    %138 = arith.negf %137 : vector<2x64xf32>
    %139 = math.exp %138 : vector<2x64xf32>
    %cst_30 = arith.constant 1.000000e+00 : f32
    %140 = vector.broadcast %cst_30 : f32 to vector<2x64xf32>
    %141 = arith.addf %140, %139 : vector<2x64xf32>
    %142 = arith.divf %140, %141 : vector<2x64xf32>
    %143 = vector.extract_strided_slice %142 {offsets = [0, 0], sizes = [2, 32], strides = [1, 1]} : vector<2x64xf32> to vector<2x32xf32>
    %144 = vector.extract_strided_slice %142 {offsets = [0, 32], sizes = [2, 32], strides = [1, 1]} : vector<2x64xf32> to vector<2x32xf32>
    %145 = vector.extract_strided_slice %128 {offsets = [0, 64], sizes = [2, 32], strides = [1, 1]} : vector<2x96xf32> to vector<2x32xf32>
    %146 = vector.extract_strided_slice %133 {offsets = [0, 64], sizes = [2, 32], strides = [1, 1]} : vector<2x96xf32> to vector<2x32xf32>
    %147 = arith.mulf %143, %146 : vector<2x32xf32>
    %148 = arith.addf %145, %147 : vector<2x32xf32>
    %149 = math.tanh %148 : vector<2x32xf32>
    %cst_31 = arith.constant 1.000000e+00 : f32
    %150 = vector.broadcast %cst_31 : f32 to vector<2x32xf32>
    %151 = arith.subf %150, %144 : vector<2x32xf32>
    %152 = arith.mulf %151, %149 : vector<2x32xf32>
    %153 = arith.mulf %144, %97 : vector<2x32xf32>
    %154 = arith.addf %152, %153 : vector<2x32xf32>
    %cst_32 = arith.constant dense<0.000000e+00> : vector<2x96xf32>
    %155 = tpu.matmul %154, %4, %cst_32 {dimension_numbers = #tpu.dot_dimension_numbers<[1], [0], [0], [1], [0, 0, 1, 1], [], []>} : vector<2x32xf32>, vector<32x96xf32>, vector<2x96xf32> -> vector<2x96xf32>
    %156 = vector.broadcast %5 : vector<1x96xf32> to vector<2x96xf32>
    %157 = arith.addf %155, %156 : vector<2x96xf32>
    %158 = vector.extract_strided_slice %157 {offsets = [0, 0], sizes = [2, 64], strides = [1, 1]} : vector<2x96xf32> to vector<2x64xf32>
    %159 = vector.extract_strided_slice %134 {offsets = [0, 0], sizes = [2, 64], strides = [1, 1]} : vector<2x96xf32> to vector<2x64xf32>
    %160 = arith.addf %158, %159 : vector<2x64xf32>
    %161 = arith.negf %160 : vector<2x64xf32>
    %162 = math.exp %161 : vector<2x64xf32>
    %cst_33 = arith.constant 1.000000e+00 : f32
    %163 = vector.broadcast %cst_33 : f32 to vector<2x64xf32>
    %164 = arith.addf %163, %162 : vector<2x64xf32>
    %165 = arith.divf %163, %164 : vector<2x64xf32>
    %166 = vector.extract_strided_slice %165 {offsets = [0, 0], sizes = [2, 32], strides = [1, 1]} : vector<2x64xf32> to vector<2x32xf32>
    %167 = vector.extract_strided_slice %165 {offsets = [0, 32], sizes = [2, 32], strides = [1, 1]} : vector<2x64xf32> to vector<2x32xf32>
    %168 = vector.extract_strided_slice %157 {offsets = [0, 64], sizes = [2, 32], strides = [1, 1]} : vector<2x96xf32> to vector<2x32xf32>
    %169 = vector.extract_strided_slice %134 {offsets = [0, 64], sizes = [2, 32], strides = [1, 1]} : vector<2x96xf32> to vector<2x32xf32>
    %170 = arith.mulf %166, %169 : vector<2x32xf32>
    %171 = arith.addf %168, %170 : vector<2x32xf32>
    %172 = math.tanh %171 : vector<2x32xf32>
    %cst_34 = arith.constant 1.000000e+00 : f32
    %173 = vector.broadcast %cst_34 : f32 to vector<2x32xf32>
    %174 = arith.subf %173, %167 : vector<2x32xf32>
    %175 = arith.mulf %174, %172 : vector<2x32xf32>
    %176 = arith.mulf %167, %120 : vector<2x32xf32>
    %177 = arith.addf %175, %176 : vector<2x32xf32>
    %c3_i32 = arith.constant 3 : i32
    %178 = arith.index_cast %c3_i32 : i32 to index
    %c0_35 = arith.constant 0 : index
    %c0_36 = arith.constant 0 : index
    %179 = vector.load %arg0[%178, %c0_35, %c0_36] : memref<8x2x1xf32, #tpu.memory_space<vmem>>, vector<1x2x1xf32>
    %180 = vector.shape_cast %179 : vector<1x2x1xf32> to vector<2x1xf32>
    %181 = vector.broadcast %180 : vector<2x1xf32> to vector<2x96xf32>
    %182 = vector.broadcast %0 : vector<1x96xf32> to vector<2x96xf32>
    %183 = arith.mulf %181, %182 : vector<2x96xf32>
    %184 = vector.broadcast %1 : vector<1x96xf32> to vector<2x96xf32>
    %185 = arith.addf %183, %184 : vector<2x96xf32>
    %186 = tpu.concatenate %154, %177 in 1 : vector<2x32xf32>, vector<2x32xf32> -> vector<2x64xf32>
    %cst_37 = arith.constant dense<0.000000e+00> : vector<2x192xf32>
    %187 = tpu.matmul %186, %2, %cst_37 {dimension_numbers = #tpu.dot_dimension_numbers<[1], [0], [0], [1], [0, 0, 1, 1], [], []>} : vector<2x64xf32>, vector<64x192xf32>, vector<2x192xf32> -> vector<2x192xf32>
    %188 = vector.broadcast %3 : vector<1x192xf32> to vector<2x192xf32>
    %189 = arith.addf %187, %188 : vector<2x192xf32>
    %190 = vector.extract_strided_slice %189 {offsets = [0, 0], sizes = [2, 96], strides = [1, 1]} : vector<2x192xf32> to vector<2x96xf32>
    %191 = vector.extract_strided_slice %189 {offsets = [0, 96], sizes = [2, 96], strides = [1, 1]} : vector<2x192xf32> to vector<2x96xf32>
    %192 = vector.extract_strided_slice %185 {offsets = [0, 0], sizes = [2, 64], strides = [1, 1]} : vector<2x96xf32> to vector<2x64xf32>
    %193 = vector.extract_strided_slice %190 {offsets = [0, 0], sizes = [2, 64], strides = [1, 1]} : vector<2x96xf32> to vector<2x64xf32>
    %194 = arith.addf %192, %193 : vector<2x64xf32>
    %195 = arith.negf %194 : vector<2x64xf32>
    %196 = math.exp %195 : vector<2x64xf32>
    %cst_38 = arith.constant 1.000000e+00 : f32
    %197 = vector.broadcast %cst_38 : f32 to vector<2x64xf32>
    %198 = arith.addf %197, %196 : vector<2x64xf32>
    %199 = arith.divf %197, %198 : vector<2x64xf32>
    %200 = vector.extract_strided_slice %199 {offsets = [0, 0], sizes = [2, 32], strides = [1, 1]} : vector<2x64xf32> to vector<2x32xf32>
    %201 = vector.extract_strided_slice %199 {offsets = [0, 32], sizes = [2, 32], strides = [1, 1]} : vector<2x64xf32> to vector<2x32xf32>
    %202 = vector.extract_strided_slice %185 {offsets = [0, 64], sizes = [2, 32], strides = [1, 1]} : vector<2x96xf32> to vector<2x32xf32>
    %203 = vector.extract_strided_slice %190 {offsets = [0, 64], sizes = [2, 32], strides = [1, 1]} : vector<2x96xf32> to vector<2x32xf32>
    %204 = arith.mulf %200, %203 : vector<2x32xf32>
    %205 = arith.addf %202, %204 : vector<2x32xf32>
    %206 = math.tanh %205 : vector<2x32xf32>
    %cst_39 = arith.constant 1.000000e+00 : f32
    %207 = vector.broadcast %cst_39 : f32 to vector<2x32xf32>
    %208 = arith.subf %207, %201 : vector<2x32xf32>
    %209 = arith.mulf %208, %206 : vector<2x32xf32>
    %210 = arith.mulf %201, %154 : vector<2x32xf32>
    %211 = arith.addf %209, %210 : vector<2x32xf32>
    %cst_40 = arith.constant dense<0.000000e+00> : vector<2x96xf32>
    %212 = tpu.matmul %211, %4, %cst_40 {dimension_numbers = #tpu.dot_dimension_numbers<[1], [0], [0], [1], [0, 0, 1, 1], [], []>} : vector<2x32xf32>, vector<32x96xf32>, vector<2x96xf32> -> vector<2x96xf32>
    %213 = vector.broadcast %5 : vector<1x96xf32> to vector<2x96xf32>
    %214 = arith.addf %212, %213 : vector<2x96xf32>
    %215 = vector.extract_strided_slice %214 {offsets = [0, 0], sizes = [2, 64], strides = [1, 1]} : vector<2x96xf32> to vector<2x64xf32>
    %216 = vector.extract_strided_slice %191 {offsets = [0, 0], sizes = [2, 64], strides = [1, 1]} : vector<2x96xf32> to vector<2x64xf32>
    %217 = arith.addf %215, %216 : vector<2x64xf32>
    %218 = arith.negf %217 : vector<2x64xf32>
    %219 = math.exp %218 : vector<2x64xf32>
    %cst_41 = arith.constant 1.000000e+00 : f32
    %220 = vector.broadcast %cst_41 : f32 to vector<2x64xf32>
    %221 = arith.addf %220, %219 : vector<2x64xf32>
    %222 = arith.divf %220, %221 : vector<2x64xf32>
    %223 = vector.extract_strided_slice %222 {offsets = [0, 0], sizes = [2, 32], strides = [1, 1]} : vector<2x64xf32> to vector<2x32xf32>
    %224 = vector.extract_strided_slice %222 {offsets = [0, 32], sizes = [2, 32], strides = [1, 1]} : vector<2x64xf32> to vector<2x32xf32>
    %225 = vector.extract_strided_slice %214 {offsets = [0, 64], sizes = [2, 32], strides = [1, 1]} : vector<2x96xf32> to vector<2x32xf32>
    %226 = vector.extract_strided_slice %191 {offsets = [0, 64], sizes = [2, 32], strides = [1, 1]} : vector<2x96xf32> to vector<2x32xf32>
    %227 = arith.mulf %223, %226 : vector<2x32xf32>
    %228 = arith.addf %225, %227 : vector<2x32xf32>
    %229 = math.tanh %228 : vector<2x32xf32>
    %cst_42 = arith.constant 1.000000e+00 : f32
    %230 = vector.broadcast %cst_42 : f32 to vector<2x32xf32>
    %231 = arith.subf %230, %224 : vector<2x32xf32>
    %232 = arith.mulf %231, %229 : vector<2x32xf32>
    %233 = arith.mulf %224, %177 : vector<2x32xf32>
    %234 = arith.addf %232, %233 : vector<2x32xf32>
    %c4_i32 = arith.constant 4 : i32
    %235 = arith.index_cast %c4_i32 : i32 to index
    %c0_43 = arith.constant 0 : index
    %c0_44 = arith.constant 0 : index
    %236 = vector.load %arg0[%235, %c0_43, %c0_44] : memref<8x2x1xf32, #tpu.memory_space<vmem>>, vector<1x2x1xf32>
    %237 = vector.shape_cast %236 : vector<1x2x1xf32> to vector<2x1xf32>
    %238 = vector.broadcast %237 : vector<2x1xf32> to vector<2x96xf32>
    %239 = vector.broadcast %0 : vector<1x96xf32> to vector<2x96xf32>
    %240 = arith.mulf %238, %239 : vector<2x96xf32>
    %241 = vector.broadcast %1 : vector<1x96xf32> to vector<2x96xf32>
    %242 = arith.addf %240, %241 : vector<2x96xf32>
    %243 = tpu.concatenate %211, %234 in 1 : vector<2x32xf32>, vector<2x32xf32> -> vector<2x64xf32>
    %cst_45 = arith.constant dense<0.000000e+00> : vector<2x192xf32>
    %244 = tpu.matmul %243, %2, %cst_45 {dimension_numbers = #tpu.dot_dimension_numbers<[1], [0], [0], [1], [0, 0, 1, 1], [], []>} : vector<2x64xf32>, vector<64x192xf32>, vector<2x192xf32> -> vector<2x192xf32>
    %245 = vector.broadcast %3 : vector<1x192xf32> to vector<2x192xf32>
    %246 = arith.addf %244, %245 : vector<2x192xf32>
    %247 = vector.extract_strided_slice %246 {offsets = [0, 0], sizes = [2, 96], strides = [1, 1]} : vector<2x192xf32> to vector<2x96xf32>
    %248 = vector.extract_strided_slice %246 {offsets = [0, 96], sizes = [2, 96], strides = [1, 1]} : vector<2x192xf32> to vector<2x96xf32>
    %249 = vector.extract_strided_slice %242 {offsets = [0, 0], sizes = [2, 64], strides = [1, 1]} : vector<2x96xf32> to vector<2x64xf32>
    %250 = vector.extract_strided_slice %247 {offsets = [0, 0], sizes = [2, 64], strides = [1, 1]} : vector<2x96xf32> to vector<2x64xf32>
    %251 = arith.addf %249, %250 : vector<2x64xf32>
    %252 = arith.negf %251 : vector<2x64xf32>
    %253 = math.exp %252 : vector<2x64xf32>
    %cst_46 = arith.constant 1.000000e+00 : f32
    %254 = vector.broadcast %cst_46 : f32 to vector<2x64xf32>
    %255 = arith.addf %254, %253 : vector<2x64xf32>
    %256 = arith.divf %254, %255 : vector<2x64xf32>
    %257 = vector.extract_strided_slice %256 {offsets = [0, 0], sizes = [2, 32], strides = [1, 1]} : vector<2x64xf32> to vector<2x32xf32>
    %258 = vector.extract_strided_slice %256 {offsets = [0, 32], sizes = [2, 32], strides = [1, 1]} : vector<2x64xf32> to vector<2x32xf32>
    %259 = vector.extract_strided_slice %242 {offsets = [0, 64], sizes = [2, 32], strides = [1, 1]} : vector<2x96xf32> to vector<2x32xf32>
    %260 = vector.extract_strided_slice %247 {offsets = [0, 64], sizes = [2, 32], strides = [1, 1]} : vector<2x96xf32> to vector<2x32xf32>
    %261 = arith.mulf %257, %260 : vector<2x32xf32>
    %262 = arith.addf %259, %261 : vector<2x32xf32>
    %263 = math.tanh %262 : vector<2x32xf32>
    %cst_47 = arith.constant 1.000000e+00 : f32
    %264 = vector.broadcast %cst_47 : f32 to vector<2x32xf32>
    %265 = arith.subf %264, %258 : vector<2x32xf32>
    %266 = arith.mulf %265, %263 : vector<2x32xf32>
    %267 = arith.mulf %258, %211 : vector<2x32xf32>
    %268 = arith.addf %266, %267 : vector<2x32xf32>
    %cst_48 = arith.constant dense<0.000000e+00> : vector<2x96xf32>
    %269 = tpu.matmul %268, %4, %cst_48 {dimension_numbers = #tpu.dot_dimension_numbers<[1], [0], [0], [1], [0, 0, 1, 1], [], []>} : vector<2x32xf32>, vector<32x96xf32>, vector<2x96xf32> -> vector<2x96xf32>
    %270 = vector.broadcast %5 : vector<1x96xf32> to vector<2x96xf32>
    %271 = arith.addf %269, %270 : vector<2x96xf32>
    %272 = vector.extract_strided_slice %271 {offsets = [0, 0], sizes = [2, 64], strides = [1, 1]} : vector<2x96xf32> to vector<2x64xf32>
    %273 = vector.extract_strided_slice %248 {offsets = [0, 0], sizes = [2, 64], strides = [1, 1]} : vector<2x96xf32> to vector<2x64xf32>
    %274 = arith.addf %272, %273 : vector<2x64xf32>
    %275 = arith.negf %274 : vector<2x64xf32>
    %276 = math.exp %275 : vector<2x64xf32>
    %cst_49 = arith.constant 1.000000e+00 : f32
    %277 = vector.broadcast %cst_49 : f32 to vector<2x64xf32>
    %278 = arith.addf %277, %276 : vector<2x64xf32>
    %279 = arith.divf %277, %278 : vector<2x64xf32>
    %280 = vector.extract_strided_slice %279 {offsets = [0, 0], sizes = [2, 32], strides = [1, 1]} : vector<2x64xf32> to vector<2x32xf32>
    %281 = vector.extract_strided_slice %279 {offsets = [0, 32], sizes = [2, 32], strides = [1, 1]} : vector<2x64xf32> to vector<2x32xf32>
    %282 = vector.extract_strided_slice %271 {offsets = [0, 64], sizes = [2, 32], strides = [1, 1]} : vector<2x96xf32> to vector<2x32xf32>
    %283 = vector.extract_strided_slice %248 {offsets = [0, 64], sizes = [2, 32], strides = [1, 1]} : vector<2x96xf32> to vector<2x32xf32>
    %284 = arith.mulf %280, %283 : vector<2x32xf32>
    %285 = arith.addf %282, %284 : vector<2x32xf32>
    %286 = math.tanh %285 : vector<2x32xf32>
    %cst_50 = arith.constant 1.000000e+00 : f32
    %287 = vector.broadcast %cst_50 : f32 to vector<2x32xf32>
    %288 = arith.subf %287, %281 : vector<2x32xf32>
    %289 = arith.mulf %288, %286 : vector<2x32xf32>
    %290 = arith.mulf %281, %234 : vector<2x32xf32>
    %291 = arith.addf %289, %290 : vector<2x32xf32>
    %c5_i32 = arith.constant 5 : i32
    %292 = arith.index_cast %c5_i32 : i32 to index
    %c0_51 = arith.constant 0 : index
    %c0_52 = arith.constant 0 : index
    %293 = vector.load %arg0[%292, %c0_51, %c0_52] : memref<8x2x1xf32, #tpu.memory_space<vmem>>, vector<1x2x1xf32>
    %294 = vector.shape_cast %293 : vector<1x2x1xf32> to vector<2x1xf32>
    %295 = vector.broadcast %294 : vector<2x1xf32> to vector<2x96xf32>
    %296 = vector.broadcast %0 : vector<1x96xf32> to vector<2x96xf32>
    %297 = arith.mulf %295, %296 : vector<2x96xf32>
    %298 = vector.broadcast %1 : vector<1x96xf32> to vector<2x96xf32>
    %299 = arith.addf %297, %298 : vector<2x96xf32>
    %300 = tpu.concatenate %268, %291 in 1 : vector<2x32xf32>, vector<2x32xf32> -> vector<2x64xf32>
    %cst_53 = arith.constant dense<0.000000e+00> : vector<2x192xf32>
    %301 = tpu.matmul %300, %2, %cst_53 {dimension_numbers = #tpu.dot_dimension_numbers<[1], [0], [0], [1], [0, 0, 1, 1], [], []>} : vector<2x64xf32>, vector<64x192xf32>, vector<2x192xf32> -> vector<2x192xf32>
    %302 = vector.broadcast %3 : vector<1x192xf32> to vector<2x192xf32>
    %303 = arith.addf %301, %302 : vector<2x192xf32>
    %304 = vector.extract_strided_slice %303 {offsets = [0, 0], sizes = [2, 96], strides = [1, 1]} : vector<2x192xf32> to vector<2x96xf32>
    %305 = vector.extract_strided_slice %303 {offsets = [0, 96], sizes = [2, 96], strides = [1, 1]} : vector<2x192xf32> to vector<2x96xf32>
    %306 = vector.extract_strided_slice %299 {offsets = [0, 0], sizes = [2, 64], strides = [1, 1]} : vector<2x96xf32> to vector<2x64xf32>
    %307 = vector.extract_strided_slice %304 {offsets = [0, 0], sizes = [2, 64], strides = [1, 1]} : vector<2x96xf32> to vector<2x64xf32>
    %308 = arith.addf %306, %307 : vector<2x64xf32>
    %309 = arith.negf %308 : vector<2x64xf32>
    %310 = math.exp %309 : vector<2x64xf32>
    %cst_54 = arith.constant 1.000000e+00 : f32
    %311 = vector.broadcast %cst_54 : f32 to vector<2x64xf32>
    %312 = arith.addf %311, %310 : vector<2x64xf32>
    %313 = arith.divf %311, %312 : vector<2x64xf32>
    %314 = vector.extract_strided_slice %313 {offsets = [0, 0], sizes = [2, 32], strides = [1, 1]} : vector<2x64xf32> to vector<2x32xf32>
    %315 = vector.extract_strided_slice %313 {offsets = [0, 32], sizes = [2, 32], strides = [1, 1]} : vector<2x64xf32> to vector<2x32xf32>
    %316 = vector.extract_strided_slice %299 {offsets = [0, 64], sizes = [2, 32], strides = [1, 1]} : vector<2x96xf32> to vector<2x32xf32>
    %317 = vector.extract_strided_slice %304 {offsets = [0, 64], sizes = [2, 32], strides = [1, 1]} : vector<2x96xf32> to vector<2x32xf32>
    %318 = arith.mulf %314, %317 : vector<2x32xf32>
    %319 = arith.addf %316, %318 : vector<2x32xf32>
    %320 = math.tanh %319 : vector<2x32xf32>
    %cst_55 = arith.constant 1.000000e+00 : f32
    %321 = vector.broadcast %cst_55 : f32 to vector<2x32xf32>
    %322 = arith.subf %321, %315 : vector<2x32xf32>
    %323 = arith.mulf %322, %320 : vector<2x32xf32>
    %324 = arith.mulf %315, %268 : vector<2x32xf32>
    %325 = arith.addf %323, %324 : vector<2x32xf32>
    %cst_56 = arith.constant dense<0.000000e+00> : vector<2x96xf32>
    %326 = tpu.matmul %325, %4, %cst_56 {dimension_numbers = #tpu.dot_dimension_numbers<[1], [0], [0], [1], [0, 0, 1, 1], [], []>} : vector<2x32xf32>, vector<32x96xf32>, vector<2x96xf32> -> vector<2x96xf32>
    %327 = vector.broadcast %5 : vector<1x96xf32> to vector<2x96xf32>
    %328 = arith.addf %326, %327 : vector<2x96xf32>
    %329 = vector.extract_strided_slice %328 {offsets = [0, 0], sizes = [2, 64], strides = [1, 1]} : vector<2x96xf32> to vector<2x64xf32>
    %330 = vector.extract_strided_slice %305 {offsets = [0, 0], sizes = [2, 64], strides = [1, 1]} : vector<2x96xf32> to vector<2x64xf32>
    %331 = arith.addf %329, %330 : vector<2x64xf32>
    %332 = arith.negf %331 : vector<2x64xf32>
    %333 = math.exp %332 : vector<2x64xf32>
    %cst_57 = arith.constant 1.000000e+00 : f32
    %334 = vector.broadcast %cst_57 : f32 to vector<2x64xf32>
    %335 = arith.addf %334, %333 : vector<2x64xf32>
    %336 = arith.divf %334, %335 : vector<2x64xf32>
    %337 = vector.extract_strided_slice %336 {offsets = [0, 0], sizes = [2, 32], strides = [1, 1]} : vector<2x64xf32> to vector<2x32xf32>
    %338 = vector.extract_strided_slice %336 {offsets = [0, 32], sizes = [2, 32], strides = [1, 1]} : vector<2x64xf32> to vector<2x32xf32>
    %339 = vector.extract_strided_slice %328 {offsets = [0, 64], sizes = [2, 32], strides = [1, 1]} : vector<2x96xf32> to vector<2x32xf32>
    %340 = vector.extract_strided_slice %305 {offsets = [0, 64], sizes = [2, 32], strides = [1, 1]} : vector<2x96xf32> to vector<2x32xf32>
    %341 = arith.mulf %337, %340 : vector<2x32xf32>
    %342 = arith.addf %339, %341 : vector<2x32xf32>
    %343 = math.tanh %342 : vector<2x32xf32>
    %cst_58 = arith.constant 1.000000e+00 : f32
    %344 = vector.broadcast %cst_58 : f32 to vector<2x32xf32>
    %345 = arith.subf %344, %338 : vector<2x32xf32>
    %346 = arith.mulf %345, %343 : vector<2x32xf32>
    %347 = arith.mulf %338, %291 : vector<2x32xf32>
    %348 = arith.addf %346, %347 : vector<2x32xf32>
    %c6_i32 = arith.constant 6 : i32
    %349 = arith.index_cast %c6_i32 : i32 to index
    %c0_59 = arith.constant 0 : index
    %c0_60 = arith.constant 0 : index
    %350 = vector.load %arg0[%349, %c0_59, %c0_60] : memref<8x2x1xf32, #tpu.memory_space<vmem>>, vector<1x2x1xf32>
    %351 = vector.shape_cast %350 : vector<1x2x1xf32> to vector<2x1xf32>
    %352 = vector.broadcast %351 : vector<2x1xf32> to vector<2x96xf32>
    %353 = vector.broadcast %0 : vector<1x96xf32> to vector<2x96xf32>
    %354 = arith.mulf %352, %353 : vector<2x96xf32>
    %355 = vector.broadcast %1 : vector<1x96xf32> to vector<2x96xf32>
    %356 = arith.addf %354, %355 : vector<2x96xf32>
    %357 = tpu.concatenate %325, %348 in 1 : vector<2x32xf32>, vector<2x32xf32> -> vector<2x64xf32>
    %cst_61 = arith.constant dense<0.000000e+00> : vector<2x192xf32>
    %358 = tpu.matmul %357, %2, %cst_61 {dimension_numbers = #tpu.dot_dimension_numbers<[1], [0], [0], [1], [0, 0, 1, 1], [], []>} : vector<2x64xf32>, vector<64x192xf32>, vector<2x192xf32> -> vector<2x192xf32>
    %359 = vector.broadcast %3 : vector<1x192xf32> to vector<2x192xf32>
    %360 = arith.addf %358, %359 : vector<2x192xf32>
    %361 = vector.extract_strided_slice %360 {offsets = [0, 0], sizes = [2, 96], strides = [1, 1]} : vector<2x192xf32> to vector<2x96xf32>
    %362 = vector.extract_strided_slice %360 {offsets = [0, 96], sizes = [2, 96], strides = [1, 1]} : vector<2x192xf32> to vector<2x96xf32>
    %363 = vector.extract_strided_slice %356 {offsets = [0, 0], sizes = [2, 64], strides = [1, 1]} : vector<2x96xf32> to vector<2x64xf32>
    %364 = vector.extract_strided_slice %361 {offsets = [0, 0], sizes = [2, 64], strides = [1, 1]} : vector<2x96xf32> to vector<2x64xf32>
    %365 = arith.addf %363, %364 : vector<2x64xf32>
    %366 = arith.negf %365 : vector<2x64xf32>
    %367 = math.exp %366 : vector<2x64xf32>
    %cst_62 = arith.constant 1.000000e+00 : f32
    %368 = vector.broadcast %cst_62 : f32 to vector<2x64xf32>
    %369 = arith.addf %368, %367 : vector<2x64xf32>
    %370 = arith.divf %368, %369 : vector<2x64xf32>
    %371 = vector.extract_strided_slice %370 {offsets = [0, 0], sizes = [2, 32], strides = [1, 1]} : vector<2x64xf32> to vector<2x32xf32>
    %372 = vector.extract_strided_slice %370 {offsets = [0, 32], sizes = [2, 32], strides = [1, 1]} : vector<2x64xf32> to vector<2x32xf32>
    %373 = vector.extract_strided_slice %356 {offsets = [0, 64], sizes = [2, 32], strides = [1, 1]} : vector<2x96xf32> to vector<2x32xf32>
    %374 = vector.extract_strided_slice %361 {offsets = [0, 64], sizes = [2, 32], strides = [1, 1]} : vector<2x96xf32> to vector<2x32xf32>
    %375 = arith.mulf %371, %374 : vector<2x32xf32>
    %376 = arith.addf %373, %375 : vector<2x32xf32>
    %377 = math.tanh %376 : vector<2x32xf32>
    %cst_63 = arith.constant 1.000000e+00 : f32
    %378 = vector.broadcast %cst_63 : f32 to vector<2x32xf32>
    %379 = arith.subf %378, %372 : vector<2x32xf32>
    %380 = arith.mulf %379, %377 : vector<2x32xf32>
    %381 = arith.mulf %372, %325 : vector<2x32xf32>
    %382 = arith.addf %380, %381 : vector<2x32xf32>
    %cst_64 = arith.constant dense<0.000000e+00> : vector<2x96xf32>
    %383 = tpu.matmul %382, %4, %cst_64 {dimension_numbers = #tpu.dot_dimension_numbers<[1], [0], [0], [1], [0, 0, 1, 1], [], []>} : vector<2x32xf32>, vector<32x96xf32>, vector<2x96xf32> -> vector<2x96xf32>
    %384 = vector.broadcast %5 : vector<1x96xf32> to vector<2x96xf32>
    %385 = arith.addf %383, %384 : vector<2x96xf32>
    %386 = vector.extract_strided_slice %385 {offsets = [0, 0], sizes = [2, 64], strides = [1, 1]} : vector<2x96xf32> to vector<2x64xf32>
    %387 = vector.extract_strided_slice %362 {offsets = [0, 0], sizes = [2, 64], strides = [1, 1]} : vector<2x96xf32> to vector<2x64xf32>
    %388 = arith.addf %386, %387 : vector<2x64xf32>
    %389 = arith.negf %388 : vector<2x64xf32>
    %390 = math.exp %389 : vector<2x64xf32>
    %cst_65 = arith.constant 1.000000e+00 : f32
    %391 = vector.broadcast %cst_65 : f32 to vector<2x64xf32>
    %392 = arith.addf %391, %390 : vector<2x64xf32>
    %393 = arith.divf %391, %392 : vector<2x64xf32>
    %394 = vector.extract_strided_slice %393 {offsets = [0, 0], sizes = [2, 32], strides = [1, 1]} : vector<2x64xf32> to vector<2x32xf32>
    %395 = vector.extract_strided_slice %393 {offsets = [0, 32], sizes = [2, 32], strides = [1, 1]} : vector<2x64xf32> to vector<2x32xf32>
    %396 = vector.extract_strided_slice %385 {offsets = [0, 64], sizes = [2, 32], strides = [1, 1]} : vector<2x96xf32> to vector<2x32xf32>
    %397 = vector.extract_strided_slice %362 {offsets = [0, 64], sizes = [2, 32], strides = [1, 1]} : vector<2x96xf32> to vector<2x32xf32>
    %398 = arith.mulf %394, %397 : vector<2x32xf32>
    %399 = arith.addf %396, %398 : vector<2x32xf32>
    %400 = math.tanh %399 : vector<2x32xf32>
    %cst_66 = arith.constant 1.000000e+00 : f32
    %401 = vector.broadcast %cst_66 : f32 to vector<2x32xf32>
    %402 = arith.subf %401, %395 : vector<2x32xf32>
    %403 = arith.mulf %402, %400 : vector<2x32xf32>
    %404 = arith.mulf %395, %348 : vector<2x32xf32>
    %405 = arith.addf %403, %404 : vector<2x32xf32>
    %c7_i32 = arith.constant 7 : i32
    %406 = arith.index_cast %c7_i32 : i32 to index
    %c0_67 = arith.constant 0 : index
    %c0_68 = arith.constant 0 : index
    %407 = vector.load %arg0[%406, %c0_67, %c0_68] : memref<8x2x1xf32, #tpu.memory_space<vmem>>, vector<1x2x1xf32>
    %408 = vector.shape_cast %407 : vector<1x2x1xf32> to vector<2x1xf32>
    %409 = vector.broadcast %408 : vector<2x1xf32> to vector<2x96xf32>
    %410 = vector.broadcast %0 : vector<1x96xf32> to vector<2x96xf32>
    %411 = arith.mulf %409, %410 : vector<2x96xf32>
    %412 = vector.broadcast %1 : vector<1x96xf32> to vector<2x96xf32>
    %413 = arith.addf %411, %412 : vector<2x96xf32>
    %414 = tpu.concatenate %382, %405 in 1 : vector<2x32xf32>, vector<2x32xf32> -> vector<2x64xf32>
    %cst_69 = arith.constant dense<0.000000e+00> : vector<2x192xf32>
    %415 = tpu.matmul %414, %2, %cst_69 {dimension_numbers = #tpu.dot_dimension_numbers<[1], [0], [0], [1], [0, 0, 1, 1], [], []>} : vector<2x64xf32>, vector<64x192xf32>, vector<2x192xf32> -> vector<2x192xf32>
    %416 = vector.broadcast %3 : vector<1x192xf32> to vector<2x192xf32>
    %417 = arith.addf %415, %416 : vector<2x192xf32>
    %418 = vector.extract_strided_slice %417 {offsets = [0, 0], sizes = [2, 96], strides = [1, 1]} : vector<2x192xf32> to vector<2x96xf32>
    %419 = vector.extract_strided_slice %417 {offsets = [0, 96], sizes = [2, 96], strides = [1, 1]} : vector<2x192xf32> to vector<2x96xf32>
    %420 = vector.extract_strided_slice %413 {offsets = [0, 0], sizes = [2, 64], strides = [1, 1]} : vector<2x96xf32> to vector<2x64xf32>
    %421 = vector.extract_strided_slice %418 {offsets = [0, 0], sizes = [2, 64], strides = [1, 1]} : vector<2x96xf32> to vector<2x64xf32>
    %422 = arith.addf %420, %421 : vector<2x64xf32>
    %423 = arith.negf %422 : vector<2x64xf32>
    %424 = math.exp %423 : vector<2x64xf32>
    %cst_70 = arith.constant 1.000000e+00 : f32
    %425 = vector.broadcast %cst_70 : f32 to vector<2x64xf32>
    %426 = arith.addf %425, %424 : vector<2x64xf32>
    %427 = arith.divf %425, %426 : vector<2x64xf32>
    %428 = vector.extract_strided_slice %427 {offsets = [0, 0], sizes = [2, 32], strides = [1, 1]} : vector<2x64xf32> to vector<2x32xf32>
    %429 = vector.extract_strided_slice %427 {offsets = [0, 32], sizes = [2, 32], strides = [1, 1]} : vector<2x64xf32> to vector<2x32xf32>
    %430 = vector.extract_strided_slice %413 {offsets = [0, 64], sizes = [2, 32], strides = [1, 1]} : vector<2x96xf32> to vector<2x32xf32>
    %431 = vector.extract_strided_slice %418 {offsets = [0, 64], sizes = [2, 32], strides = [1, 1]} : vector<2x96xf32> to vector<2x32xf32>
    %432 = arith.mulf %428, %431 : vector<2x32xf32>
    %433 = arith.addf %430, %432 : vector<2x32xf32>
    %434 = math.tanh %433 : vector<2x32xf32>
    %cst_71 = arith.constant 1.000000e+00 : f32
    %435 = vector.broadcast %cst_71 : f32 to vector<2x32xf32>
    %436 = arith.subf %435, %429 : vector<2x32xf32>
    %437 = arith.mulf %436, %434 : vector<2x32xf32>
    %438 = arith.mulf %429, %382 : vector<2x32xf32>
    %439 = arith.addf %437, %438 : vector<2x32xf32>
    %cst_72 = arith.constant dense<0.000000e+00> : vector<2x96xf32>
    %440 = tpu.matmul %439, %4, %cst_72 {dimension_numbers = #tpu.dot_dimension_numbers<[1], [0], [0], [1], [0, 0, 1, 1], [], []>} : vector<2x32xf32>, vector<32x96xf32>, vector<2x96xf32> -> vector<2x96xf32>
    %441 = vector.broadcast %5 : vector<1x96xf32> to vector<2x96xf32>
    %442 = arith.addf %440, %441 : vector<2x96xf32>
    %443 = vector.extract_strided_slice %442 {offsets = [0, 0], sizes = [2, 64], strides = [1, 1]} : vector<2x96xf32> to vector<2x64xf32>
    %444 = vector.extract_strided_slice %419 {offsets = [0, 0], sizes = [2, 64], strides = [1, 1]} : vector<2x96xf32> to vector<2x64xf32>
    %445 = arith.addf %443, %444 : vector<2x64xf32>
    %446 = arith.negf %445 : vector<2x64xf32>
    %447 = math.exp %446 : vector<2x64xf32>
    %cst_73 = arith.constant 1.000000e+00 : f32
    %448 = vector.broadcast %cst_73 : f32 to vector<2x64xf32>
    %449 = arith.addf %448, %447 : vector<2x64xf32>
    %450 = arith.divf %448, %449 : vector<2x64xf32>
    %451 = vector.extract_strided_slice %450 {offsets = [0, 0], sizes = [2, 32], strides = [1, 1]} : vector<2x64xf32> to vector<2x32xf32>
    %452 = vector.extract_strided_slice %450 {offsets = [0, 32], sizes = [2, 32], strides = [1, 1]} : vector<2x64xf32> to vector<2x32xf32>
    %453 = vector.extract_strided_slice %442 {offsets = [0, 64], sizes = [2, 32], strides = [1, 1]} : vector<2x96xf32> to vector<2x32xf32>
    %454 = vector.extract_strided_slice %419 {offsets = [0, 64], sizes = [2, 32], strides = [1, 1]} : vector<2x96xf32> to vector<2x32xf32>
    %455 = arith.mulf %451, %454 : vector<2x32xf32>
    %456 = arith.addf %453, %455 : vector<2x32xf32>
    %457 = math.tanh %456 : vector<2x32xf32>
    %cst_74 = arith.constant 1.000000e+00 : f32
    %458 = vector.broadcast %cst_74 : f32 to vector<2x32xf32>
    %459 = arith.subf %458, %452 : vector<2x32xf32>
    %460 = arith.mulf %459, %457 : vector<2x32xf32>
    %461 = arith.mulf %452, %405 : vector<2x32xf32>
    %462 = arith.addf %460, %461 : vector<2x32xf32>
    %c8_i32 = arith.constant 8 : i32
    %c0_75 = arith.constant 0 : index
    %c0_76 = arith.constant 0 : index
    %463 = vector.load %arg7[%c0_75, %c0_76] : memref<1x32xf32, #tpu.memory_space<vmem>>, vector<1x32xf32>
    %464 = vector.broadcast %463 : vector<1x32xf32> to vector<2x32xf32>
    %465 = arith.mulf %462, %464 : vector<2x32xf32>
    %cst_77 = arith.constant dense<0.000000e+00> : vector<2xf32>
    %466 = vector.multi_reduction <add>, %465, %cst_77 [1] : vector<2x32xf32> to vector<2xf32>
    %467 = vector.shape_cast %466 : vector<2xf32> to vector<2x1xf32>
    %c0_78 = arith.constant 0 : index
    %c0_79 = arith.constant 0 : index
    %468 = vector.load %arg8[%c0_78, %c0_79] : memref<1x1xf32, #tpu.memory_space<vmem>>, vector<1x1xf32>
    %469 = vector.broadcast %468 : vector<1x1xf32> to vector<2x1xf32>
    %470 = arith.addf %467, %469 : vector<2x1xf32>
    %c0_80 = arith.constant 0 : index
    %c0_81 = arith.constant 0 : index
    %471 = vector.load %arg9[%c0_80, %c0_81] : memref<2x1xf32, #tpu.memory_space<vmem>>, vector<2x1xf32>
    tpu.vector_store %arg9[%c0_80, %c0_81], %470 {strides = array<i32>} : memref<2x1xf32, #tpu.memory_space<vmem>>, vector<2x1xf32>,
    return
  }
}

</mosaic_0001>

<llo_original>
// kernel: tpu_custom_call.1
$region0: #{tpu_custom_call.1}
  #allocation0 [shape = 'u32[]', space=smem, size = 0x4, offset = 0x4, fixed_abs, tag = 'smem constant byte address 0x4 - core index']
  #allocation1 [shape = 'u32[144,128]{1,0:T(1,128)}', space=vmem, size = 0x12000, scoped, tag = 'internal scratch']
  #allocation2 [shape = 'f32[1,1]{1,0:T(1,128)S(1)}', space=vmem, size = 0x200, scoped, tag = 'scoped memory for tpu_custom_call.1']
  %s0 = inlined_call_operand.vmem [shape: f32[8,2,1], index: 0, kind: input, shape index: {}]
  %s1 = inlined_call_operand.vmem [shape: f32[1,96], index: 1, kind: input, shape index: {}]
  %s2 = inlined_call_operand.vmem [shape: f32[1,96], index: 2, kind: input, shape index: {}]
  %s3 = inlined_call_operand.hbm [shape: f32[64,192], index: 3, kind: input, shape index: {}]
  %s4 = inlined_call_operand.vmem [shape: f32[1,192], index: 4, kind: input, shape index: {}]
  %s5 = inlined_call_operand.vmem [shape: f32[32,96], index: 5, kind: input, shape index: {}]
  %s6 = inlined_call_operand.vmem [shape: f32[1,96], index: 6, kind: input, shape index: {}]
  %s7 = inlined_call_operand.vmem [shape: f32[1,32], index: 7, kind: input, shape index: {}]
  %s8 = inlined_call_operand.<no memory space> [shape: f32[1,1], index: 8, kind: input, shape index: {}]
  %s9 = inlined_call_operand.vmem [shape: f32[2,1], index: 9, kind: output, shape index: {}]
  %s10 = sld [smem:[#allocation0]]
  $region50: #{tpu_custom_call.1} parent=0
    _
  %s12 = ssub.s32 1, %s10
  %s13 = scalar_select 0, %s12, %s10
  %v14 = vstv %s8
  %15 = vst [vmem:[#allocation2] sm:$0x1] %v14
  $region1: #{tpu_custom_call.1} parent=0
    #allocation3 [shape = 'u8[65536]{0}', space=vmem, size = 0x10000, scoped, tag = 'input window, operand 3, single buffered']
    #allocation4 [shape = 's32[1]{0}', space=sflag, size = 0x4, scoped, tag = 'scoped memory for tpu_custom_call.1']
    %16 = vsyncpa [#allocation4], 0
    // Predicated region
    $region2: #{tpu_custom_call.1} parent=1 // pred_check
      _
    $region3: #{tpu_custom_call.1} parent=1 // pred_check_branch
      %18 = sbr.rel (0) target = $region5
    $region4: #{tpu_custom_call.1} parent=1 // pred_region
      _
    $region5: #{tpu_custom_call.1} parent=1 // pred_fallthru
      _
    // Predicated region
    $region6: #{tpu_custom_call.1} parent=1 // pred_check
      _
    $region7: #{tpu_custom_call.1} parent=1 // pred_check_branch
      %20 = sbr.rel (0) target = $region9
    $region8: #{tpu_custom_call.1} parent=1 // pred_region
      _
    $region9: #{tpu_custom_call.1} parent=1 // pred_fallthru
      _
    // Predicated region
    $region10: #{tpu_custom_call.1} parent=1 // pred_check
      _
    $region11: #{tpu_custom_call.1} parent=1 // pred_check_branch
      %22 = sbr.rel (0) target = $region13
    $region12: #{tpu_custom_call.1} parent=1 // pred_region
      _
    $region13: #{tpu_custom_call.1} parent=1 // pred_fallthru
      _
    // Predicated region
    $region14: #{tpu_custom_call.1} parent=1 // pred_check
      _
    $region15: #{tpu_custom_call.1} parent=1 // pred_check_branch
      %24 = sbr.rel (0) target = $region17
    $region16: #{tpu_custom_call.1} parent=1 // pred_region
      %s26 = ssub.s32 2048, 2048
      %27 = vsyncadd [#allocation4], %s26
      %s28 = sshll.u32 [#allocation3], 4
      %s29 = int_to_ptr.vmem [resolvable:$true] %s28
      %34 = dma.hbm_to_vmem [thread:$0]  %s3, 2048, %s29, [#allocation4], 256, 256, 16
    $region17: #{tpu_custom_call.1} parent=1 // pred_fallthru
      _
    // Predicated region
    $region18: #{tpu_custom_call.1} parent=1 // pred_check
      _
    $region19: #{tpu_custom_call.1} parent=1 // pred_check_branch
      %36 = sbr.rel (0) target = $region21
    $region20: #{tpu_custom_call.1} parent=1 // pred_region
      _
    $region21: #{tpu_custom_call.1} parent=1 // pred_fallthru
      _
    // Predicated region
    $region22: #{tpu_custom_call.1} parent=1 // pred_check
      _
    $region23: #{tpu_custom_call.1} parent=1 // pred_check_branch
      %38 = sbr.rel (0) target = $region25
    $region24: #{tpu_custom_call.1} parent=1 // pred_region
      _
    $region25: #{tpu_custom_call.1} parent=1 // pred_fallthru
      _
    // Predicated region
    $region26: #{tpu_custom_call.1} parent=1 // pred_check
      _
    $region27: #{tpu_custom_call.1} parent=1 // pred_check_branch
      %40 = sbr.rel (0) target = $region29
    $region28: #{tpu_custom_call.1} parent=1 // pred_region
      _
    $region29: #{tpu_custom_call.1} parent=1 // pred_fallthru
      _
    // Predicated region
    $region30: #{tpu_custom_call.1} parent=1 // pred_check
      _
    $region31: #{tpu_custom_call.1} parent=1 // pred_check_branch
      %42 = sbr.rel (0) target = $region33
    $region32: #{tpu_custom_call.1} parent=1 // pred_region
      _
    $region33: #{tpu_custom_call.1} parent=1 // pred_fallthru
      _
    // Predicated region
    $region34: #{tpu_custom_call.1} parent=1 // pred_check
      _
    $region35: #{tpu_custom_call.1} parent=1 // pred_check_branch
      %44 = sbr.rel (0) target = $region37
    $region36: #{tpu_custom_call.1} parent=1 // pred_region
      _
    $region37: #{tpu_custom_call.1} parent=1 // pred_fallthru
      _
    // Predicated region
    $region38: #{tpu_custom_call.1} parent=1 // pred_check
      _
    $region39: #{tpu_custom_call.1} parent=1 // pred_check_branch
      %46 = sbr.rel (0) target = $region41
    $region40: #{tpu_custom_call.1} parent=1 // pred_region
      %47 = dma.done [#allocation4], 2048
    $region41: #{tpu_custom_call.1} parent=1 // pred_fallthru
      _
    %v48 = vld [vmem:[%s1] sm:$0x1]
    %v49 = vld [vmem:[%s2] sm:$0x1]
    %v50 = vld [vmem:[#allocation3] sm:$0xff]
    %v51 = vld [vmem:[#allocation3 + $0x8] sm:$0xff]
    %v52 = vld [vmem:[#allocation3 + $0x10] sm:$0xff]
    %v53 = vld [vmem:[#allocation3 + $0x18] sm:$0xff]
    %v54 = vld [vmem:[#allocation3 + $0x20] sm:$0xff]
    %v55 = vld [vmem:[#allocation3 + $0x28] sm:$0xff]
    %v56 = vld [vmem:[#allocation3 + $0x30] sm:$0xff]
    %v57 = vld [vmem:[#allocation3 + $0x38] sm:$0xff]
    %v58 = vld [vmem:[#allocation3 + $0x40] sm:$0xff]
    %v59 = vld [vmem:[#allocation3 + $0x48] sm:$0xff]
    %v60 = vld [vmem:[#allocation3 + $0x50] sm:$0xff]
    %v61 = vld [vmem:[#allocation3 + $0x58] sm:$0xff]
    %v62 = vld [vmem:[#allocation3 + $0x60] sm:$0xff]
    %v63 = vld [vmem:[#allocation3 + $0x68] sm:$0xff]
    %v64 = vld [vmem:[#allocation3 + $0x70] sm:$0xff]
    %v65 = vld [vmem:[#allocation3 + $0x78] sm:$0xff]
    %v66 = vld [vmem:[%s4] sm:$0x3]
    %v67 = vld [vmem:[%s5] sm:$0xff]
    %v68 = vld [vmem:[%s5 + $0x8] sm:$0xff]
    %v69 = vld [vmem:[%s5 + $0x10] sm:$0xff]
    %v70 = vld [vmem:[%s5 + $0x18] sm:$0xff]
    %v71 = vld [vmem:[%s6] sm:$0x1]
    %v72 = vld [vmem:[%s0] sm:$0x3]
    %74 = vset.pattern.permute.xlu0 0
    %75 = vperm.xlu0 %74, %v72
    %v76 = vpop.permute.xlu0 %75
    %v79 = vlaneseq
    %v80 = vshrl.u32 %v79, 7
    %v81 = vsub.s32 0, %v80
    %v82 = vrot.slane %v48, %v81
    %v84 = vmul.f32 %v76, %v82
    %v86 = vlaneseq
    %v87 = vshrl.u32 %v86, 7
    %v88 = vsub.s32 0, %v87
    %v89 = vrot.slane %v49, %v88
    %v91 = vadd.f32 %v84, %v89
    %v93 = vlaneseq
    %v94 = vshrl.u32 %v93, 7
    %v95 = vsub.s32 0, %v94
    %v96 = vrot.slane %v66, %v95
    %v97 = vlaneseq
    %v98 = vshrl.u32 %v97, 7
    %v99 = vsub.s32 1, %v98
    %v100 = vrot.slane %v66, %v99
    %vm103 = vcmask 523264
    %v105 = vsel %vm103, 0.0, 0
    %107 = vmatprep.subr.mxu0 %v51
    %108 = vmatpush1.msra.mxu0 %v50
    %109 = vmatprep.subr.mxu0 %v53
    %110 = vmatpush1.msra.mxu0 %v52
    %111 = vmatprep.subr.mxu0 %v55
    %112 = vmatpush1.msra.mxu0 %v54
    %113 = vmatprep.subr.mxu0 %v57
    %114 = vmatpush1.msra.mxu0 %v56
    %115 = vmatprep.subr.mxu0 %v59
    %116 = vmatpush1.msra.mxu0 %v58
    %117 = vmatprep.subr.mxu0 %v61
    %118 = vmatpush1.msra.mxu0 %v60
    %119 = vmatprep.subr.mxu0 %v63
    %120 = vmatpush1.msra.mxu0 %v62
    %121 = vmatprep.subr.mxu0 %v65
    %122 = vmatpush1.msra.mxu0 %v64
    %123 = vmatprep.subr.mxu0 0.0
    %124 = vmatpush1.msra.mxu0 0.0
    %125 = vmatprep.subr.mxu0 0.0
    %126 = vmatpush1.msra.mxu0 0.0
    %127 = vmatprep.subr.mxu0 0.0
    %128 = vmatpush1.msra.mxu0 0.0
    %129 = vmatprep.subr.mxu0 0.0
    %130 = vmatpush1.msra.mxu0 0.0
    %131 = vmatprep.subr.mxu0 0.0
    %132 = vmatpush1.msra.mxu0 0.0
    %133 = vmatprep.subr.mxu0 0.0
    %134 = vmatpush1.msra.mxu0 0.0
    %135 = vmatprep.subr.mxu0 0.0
    %136 = vmatpush1.msra.mxu0 0.0
    %137 = vmatprep.subr.mxu0 0.0
    %138 = vmatpush1.msra.mxu0 0.0
    %139 = vmatprep.subr.mxu0 0.0
    %140 = vmatpush1.msra.mxu0 0.0
    %141 = vmatprep.subr.mxu0 0.0
    %142 = vmatpush1.msra.mxu0 0.0
    %143 = vmatprep.subr.mxu0 0.0
    %144 = vmatpush1.msra.mxu0 0.0
    %145 = vmatprep.subr.mxu0 0.0
    %146 = vmatpush1.msra.mxu0 0.0
    %147 = vmatprep.subr.mxu0 0.0
    %148 = vmatpush1.msra.mxu0 0.0
    %149 = vmatprep.subr.mxu0 0.0
    %150 = vmatpush1.msra.mxu0 0.0
    %151 = vmatprep.subr.mxu0 0.0
    %152 = vmatpush1.msra.mxu0 0.0
    %153 = vmatprep.subr.mxu0 0.0
    %154 = vmatpush1.msra.mxu0 0.0
    %155 = vmatprep.subr.mxu0 0.0
    %156 = vmatpush1.msra.mxu0 0.0
    %157 = vmatprep.subr.mxu0 0.0
    %158 = vmatpush1.msra.mxu0 0.0
    %159 = vmatprep.subr.mxu0 0.0
    %160 = vmatpush1.msra.mxu0 0.0
    %161 = vmatprep.subr.mxu0 0.0
    %162 = vmatpush1.msra.mxu0 0.0
    %163 = vmatprep.subr.mxu0 0.0
    %164 = vmatpush1.msra.mxu0 0.0
    %165 = vmatprep.subr.mxu0 0.0
    %166 = vmatpush1.msra.mxu0 0.0
    %167 = vmatprep.subr.mxu0 0.0
    %168 = vmatpush1.msra.mxu0 0.0
    %169 = vmatprep.subr.mxu0 0.0
    %170 = vmatpush1.msra.mxu0 0.0
    %171 = vmatprep.mubr.f32.mxu0 0.0
    %172 = vmatmul.mubr.f32.gmra.mrb[0].mxu0 %v105
    %v173 = vpop.f32.mrb[0].mxu0
    %v174 = vadd.f32 %v96, %v173
    %v175 = vpop.f32.mrb[0].mxu0
    %v176 = vadd.f32 %v100, %v175
    %177 = vdwg.mxu0
    %v178 = vadd.f32 %v91, %v174
    %v179 = vxor.u32 %v178, 2147483648
    %v180 = vmul.f32 %v179, 1.442695
    %v181 = vpow.pop %v180
    %v182 = vadd.f32 %v181, 1.0
    %v183 = vrcp.pop %v182
    %v184 = vmul.f32 1.0, %v183
    %186 = vrot.lane.b32.xlu0 %v174, 64
    %v187 = vpop.permute.xlu0 %186
    %v189 = vmul.f32 %v184, %v187
    %191 = vrot.lane.b32.xlu0 %v189, 64
    %v192 = vpop.permute.xlu0 %191
    %v194 = vadd.f32 %v91, %v192
    %v195 = vtanh.pop %v194
    %v196 = vsub.f32 1.0, %v184
    %198 = vrot.lane.b32.xlu0 %v195, 96
    %v199 = vpop.permute.xlu0 %198
    %v201 = vmul.f32 %v196, %v199
    %v202 = vmul.f32 %v184, 0.0
    %v203 = vadd.f32 %v201, %v202
    %v205 = vlaneseq
    %v206 = vshrl.u32 %v205, 7
    %v207 = vsub.s32 0, %v206
    %v208 = vrot.slane %v71, %v207
    %211 = vrot.lane.b32.xlu0 %v203, 96
    %v212 = vpop.permute.xlu0 %211
    %vm213 = vcmask 261120
    %v214 = vsel %vm213, %v212, 0
    %216 = vmatprep.subr.mxu0 0.0
    %217 = vmatpush1.msra.mxu0 %v67
    %218 = vmatprep.subr.mxu0 0.0
    %219 = vmatpush1.msra.mxu0 %v68
    %220 = vmatprep.subr.mxu0 0.0
    %221 = vmatpush1.msra.mxu0 %v69
    %222 = vmatprep.subr.mxu0 0.0
    %223 = vmatpush1.msra.mxu0 %v70
    %224 = vmatprep.subr.mxu0 0.0
    %225 = vmatpush1.msra.mxu0 0.0
    %226 = vmatprep.subr.mxu0 0.0
    %227 = vmatpush1.msra.mxu0 0.0
    %228 = vmatprep.subr.mxu0 0.0
    %229 = vmatpush1.msra.mxu0 0.0
    %230 = vmatprep.subr.mxu0 0.0
    %231 = vmatpush1.msra.mxu0 0.0
    %232 = vmatprep.subr.mxu0 0.0
    %233 = vmatpush1.msra.mxu0 0.0
    %234 = vmatprep.subr.mxu0 0.0
    %235 = vmatpush1.msra.mxu0 0.0
    %236 = vmatprep.subr.mxu0 0.0
    %237 = vmatpush1.msra.mxu0 0.0
    %238 = vmatprep.subr.mxu0 0.0
    %239 = vmatpush1.msra.mxu0 0.0
    %240 = vmatprep.subr.mxu0 0.0
    %241 = vmatpush1.msra.mxu0 0.0
    %242 = vmatprep.subr.mxu0 0.0
    %243 = vmatpush1.msra.mxu0 0.0
    %244 = vmatprep.subr.mxu0 0.0
    %245 = vmatpush1.msra.mxu0 0.0
    %246 = vmatprep.subr.mxu0 0.0
    %247 = vmatpush1.msra.mxu0 0.0
    %248 = vmatprep.subr.mxu0 0.0
    %249 = vmatpush1.msra.mxu0 0.0
    %250 = vmatprep.subr.mxu0 0.0
    %251 = vmatpush1.msra.mxu0 0.0
    %252 = vmatprep.subr.mxu0 0.0
    %253 = vmatpush1.msra.mxu0 0.0
    %254 = vmatprep.subr.mxu0 0.0
    %255 = vmatpush1.msra.mxu0 0.0
    %256 = vmatprep.subr.mxu0 0.0
    %257 = vmatpush1.msra.mxu0 0.0
    %258 = vmatprep.subr.mxu0 0.0
    %259 = vmatpush1.msra.mxu0 0.0
    %260 = vmatprep.subr.mxu0 0.0
    %261 = vmatpush1.msra.mxu0 0.0
    %262 = vmatprep.subr.mxu0 0.0
    %263 = vmatpush1.msra.mxu0 0.0
    %264 = vmatprep.subr.mxu0 0.0
    %265 = vmatpush1.msra.mxu0 0.0
    %266 = vmatprep.subr.mxu0 0.0
    %267 = vmatpush1.msra.mxu0 0.0
    %268 = vmatprep.subr.mxu0 0.0
    %269 = vmatpush1.msra.mxu0 0.0
    %270 = vmatprep.subr.mxu0 0.0
    %271 = vmatpush1.msra.mxu0 0.0
    %272 = vmatprep.subr.mxu0 0.0
    %273 = vmatpush1.msra.mxu0 0.0
    %274 = vmatprep.subr.mxu0 0.0
    %275 = vmatpush1.msra.mxu0 0.0
    %276 = vmatprep.subr.mxu0 0.0
    %277 = vmatpush1.msra.mxu0 0.0
    %278 = vmatprep.subr.mxu0 0.0
    %279 = vmatpush1.msra.mxu0 0.0
    %280 = vmatprep.mubr.f32.mxu0 0.0
    %281 = vmatmul.mubr.f32.gmra.mrb[0].mxu0 %v214
    %v282 = vpop.f32.mrb[0].mxu0
    %v283 = vadd.f32 %v208, %v282
    %v284 = vpop.f32.mrb[0].mxu0
    %285 = vdwg.mxu0
    %287 = vrot.lane.b32.xlu0 %v174, 32
    %v288 = vpop.permute.xlu0 %287
    %289 = vrot.lane.b32.xlu0 %v176, 32
    %v290 = vpop.permute.xlu0 %289
    %v291 = vsel %vm213, %v288, %v290
    %v293 = vadd.f32 %v283, %v291
    %v294 = vxor.u32 %v293, 2147483648
    %v295 = vmul.f32 %v294, 1.442695
    %v296 = vpow.pop %v295
    %v297 = vadd.f32 %v296, 1.0
    %v298 = vrcp.pop %v297
    %v299 = vmul.f32 1.0, %v298
    %300 = vrot.lane.b32.xlu0 %v176, 96
    %v301 = vpop.permute.xlu0 %300
    %v303 = vmul.f32 %v299, %v301
    %305 = vrot.lane.b32.xlu0 %v303, 64
    %v306 = vpop.permute.xlu0 %305
    %v308 = vadd.f32 %v283, %v306
    %v309 = vtanh.pop %v308
    %v310 = vsub.f32 1.0, %v299
    %312 = vrot.lane.b32.xlu0 %v309, 96
    %v313 = vpop.permute.xlu0 %312
    %v315 = vmul.f32 %v310, %v313
    %v316 = vmul.f32 %v299, 0.0
    %v317 = vadd.f32 %v315, %v316
    %s318 = scalar_lea.vmem %s0, 2
    %v319 = vld [vmem:[%s318] sm:$0x3]
    %321 = vset.pattern.permute.xlu0 0
    %322 = vperm.xlu0 %321, %v319
    %v323 = vpop.permute.xlu0 %322
    %v325 = vmul.f32 %v323, %v82
    %v326 = vadd.f32 %v325, %v89
    %v328 = vsel %vm213, %v212, %v317
    %v330 = vsel %vm103, %v328, 0
    %332 = vmatprep.subr.mxu0 %v51
    %333 = vmatpush1.msra.mxu0 %v50
    %334 = vmatprep.subr.mxu0 %v53
    %335 = vmatpush1.msra.mxu0 %v52
    %336 = vmatprep.subr.mxu0 %v55
    %337 = vmatpush1.msra.mxu0 %v54
    %338 = vmatprep.subr.mxu0 %v57
    %339 = vmatpush1.msra.mxu0 %v56
    %340 = vmatprep.subr.mxu0 %v59
    %341 = vmatpush1.msra.mxu0 %v58
    %342 = vmatprep.subr.mxu0 %v61
    %343 = vmatpush1.msra.mxu0 %v60
    %344 = vmatprep.subr.mxu0 %v63
    %345 = vmatpush1.msra.mxu0 %v62
    %346 = vmatprep.subr.mxu0 %v65
    %347 = vmatpush1.msra.mxu0 %v64
    %348 = vmatprep.subr.mxu0 0.0
    %349 = vmatpush1.msra.mxu0 0.0
    %350 = vmatprep.subr.mxu0 0.0
    %351 = vmatpush1.msra.mxu0 0.0
    %352 = vmatprep.subr.mxu0 0.0
    %353 = vmatpush1.msra.mxu0 0.0
    %354 = vmatprep.subr.mxu0 0.0
    %355 = vmatpush1.msra.mxu0 0.0
    %356 = vmatprep.subr.mxu0 0.0
    %357 = vmatpush1.msra.mxu0 0.0
    %358 = vmatprep.subr.mxu0 0.0
    %359 = vmatpush1.msra.mxu0 0.0
    %360 = vmatprep.subr.mxu0 0.0
    %361 = vmatpush1.msra.mxu0 0.0
    %362 = vmatprep.subr.mxu0 0.0
    %363 = vmatpush1.msra.mxu0 0.0
    %364 = vmatprep.subr.mxu0 0.0
    %365 = vmatpush1.msra.mxu0 0.0
    %366 = vmatprep.subr.mxu0 0.0
    %367 = vmatpush1.msra.mxu0 0.0
    %368 = vmatprep.subr.mxu0 0.0
    %369 = vmatpush1.msra.mxu0 0.0
    %370 = vmatprep.subr.mxu0 0.0
    %371 = vmatpush1.msra.mxu0 0.0
    %372 = vmatprep.subr.mxu0 0.0
    %373 = vmatpush1.msra.mxu0 0.0
    %374 = vmatprep.subr.mxu0 0.0
    %375 = vmatpush1.msra.mxu0 0.0
    %376 = vmatprep.subr.mxu0 0.0
    %377 = vmatpush1.msra.mxu0 0.0
    %378 = vmatprep.subr.mxu0 0.0
    %379 = vmatpush1.msra.mxu0 0.0
    %380 = vmatprep.subr.mxu0 0.0
    %381 = vmatpush1.msra.mxu0 0.0
    %382 = vmatprep.subr.mxu0 0.0
    %383 = vmatpush1.msra.mxu0 0.0
    %384 = vmatprep.subr.mxu0 0.0
    %385 = vmatpush1.msra.mxu0 0.0
    %386 = vmatprep.subr.mxu0 0.0
    %387 = vmatpush1.msra.mxu0 0.0
    %388 = vmatprep.subr.mxu0 0.0
    %389 = vmatpush1.msra.mxu0 0.0
    %390 = vmatprep.subr.mxu0 0.0
    %391 = vmatpush1.msra.mxu0 0.0
    %392 = vmatprep.subr.mxu0 0.0
    %393 = vmatpush1.msra.mxu0 0.0
    %394 = vmatprep.subr.mxu0 0.0
    %395 = vmatpush1.msra.mxu0 0.0
    %396 = vmatprep.mubr.f32.mxu0 0.0
    %397 = vmatmul.mubr.f32.gmra.mrb[0].mxu0 %v330
    %v398 = vpop.f32.mrb[0].mxu0
    %v399 = vadd.f32 %v96, %v398
    %v400 = vpop.f32.mrb[0].mxu0
    %v401 = vadd.f32 %v100, %v400
    %402 = vdwg.mxu0
    %v403 = vadd.f32 %v326, %v399
    %v404 = vxor.u32 %v403, 2147483648
    %v405 = vmul.f32 %v404, 1.442695
    %v406 = vpow.pop %v405
    %v407 = vadd.f32 %v406, 1.0
    %v408 = vrcp.pop %v407
    %v409 = vmul.f32 1.0, %v408
    %411 = vrot.lane.b32.xlu0 %v399, 64
    %v412 = vpop.permute.xlu0 %411
    %v414 = vmul.f32 %v409, %v412
    %416 = vrot.lane.b32.xlu0 %v414, 64
    %v417 = vpop.permute.xlu0 %416
    %v419 = vadd.f32 %v326, %v417
    %v420 = vtanh.pop %v419
    %v421 = vsub.f32 1.0, %v409
    %423 = vrot.lane.b32.xlu0 %v420, 96
    %v424 = vpop.permute.xlu0 %423
    %v426 = vmul.f32 %v421, %v424
    %v427 = vmul.f32 %v409, %v203
    %v428 = vadd.f32 %v426, %v427
    %430 = vrot.lane.b32.xlu0 %v428, 96
    %v431 = vpop.permute.xlu0 %430
    %v432 = vsel %vm213, %v431, 0
    %434 = vmatprep.subr.mxu0 0.0
    %435 = vmatpush1.msra.mxu0 %v67
    %436 = vmatprep.subr.mxu0 0.0
    %437 = vmatpush1.msra.mxu0 %v68
    %438 = vmatprep.subr.mxu0 0.0
    %439 = vmatpush1.msra.mxu0 %v69
    %440 = vmatprep.subr.mxu0 0.0
    %441 = vmatpush1.msra.mxu0 %v70
    %442 = vmatprep.subr.mxu0 0.0
    %443 = vmatpush1.msra.mxu0 0.0
    %444 = vmatprep.subr.mxu0 0.0
    %445 = vmatpush1.msra.mxu0 0.0
    %446 = vmatprep.subr.mxu0 0.0
    %447 = vmatpush1.msra.mxu0 0.0
    %448 = vmatprep.subr.mxu0 0.0
    %449 = vmatpush1.msra.mxu0 0.0
    %450 = vmatprep.subr.mxu0 0.0
    %451 = vmatpush1.msra.mxu0 0.0
    %452 = vmatprep.subr.mxu0 0.0
    %453 = vmatpush1.msra.mxu0 0.0
    %454 = vmatprep.subr.mxu0 0.0
    %455 = vmatpush1.msra.mxu0 0.0
    %456 = vmatprep.subr.mxu0 0.0
    %457 = vmatpush1.msra.mxu0 0.0
    %458 = vmatprep.subr.mxu0 0.0
    %459 = vmatpush1.msra.mxu0 0.0
    %460 = vmatprep.subr.mxu0 0.0
    %461 = vmatpush1.msra.mxu0 0.0
    %462 = vmatprep.subr.mxu0 0.0
    %463 = vmatpush1.msra.mxu0 0.0
    %464 = vmatprep.subr.mxu0 0.0
    %465 = vmatpush1.msra.mxu0 0.0
    %466 = vmatprep.subr.mxu0 0.0
    %467 = vmatpush1.msra.mxu0 0.0
    %468 = vmatprep.subr.mxu0 0.0
    %469 = vmatpush1.msra.mxu0 0.0
    %470 = vmatprep.subr.mxu0 0.0
    %471 = vmatpush1.msra.mxu0 0.0
    %472 = vmatprep.subr.mxu0 0.0
    %473 = vmatpush1.msra.mxu0 0.0
    %474 = vmatprep.subr.mxu0 0.0
    %475 = vmatpush1.msra.mxu0 0.0
    %476 = vmatprep.subr.mxu0 0.0
    %477 = vmatpush1.msra.mxu0 0.0
    %478 = vmatprep.subr.mxu0 0.0
    %479 = vmatpush1.msra.mxu0 0.0
    %480 = vmatprep.subr.mxu0 0.0
    %481 = vmatpush1.msra.mxu0 0.0
    %482 = vmatprep.subr.mxu0 0.0
    %483 = vmatpush1.msra.mxu0 0.0
    %484 = vmatprep.subr.mxu0 0.0
    %485 = vmatpush1.msra.mxu0 0.0
    %486 = vmatprep.subr.mxu0 0.0
    %487 = vmatpush1.msra.mxu0 0.0
    %488 = vmatprep.subr.mxu0 0.0
    %489 = vmatpush1.msra.mxu0 0.0
    %490 = vmatprep.subr.mxu0 0.0
    %491 = vmatpush1.msra.mxu0 0.0
    %492 = vmatprep.subr.mxu0 0.0
    %493 = vmatpush1.msra.mxu0 0.0
    %494 = vmatprep.subr.mxu0 0.0
    %495 = vmatpush1.msra.mxu0 0.0
    %496 = vmatprep.subr.mxu0 0.0
    %497 = vmatpush1.msra.mxu0 0.0
    %498 = vmatprep.mubr.f32.mxu0 0.0
    %499 = vmatmul.mubr.f32.gmra.mrb[0].mxu0 %v432
    %v500 = vpop.f32.mrb[0].mxu0
    %v501 = vadd.f32 %v208, %v500
    %v502 = vpop.f32.mrb[0].mxu0
    %503 = vdwg.mxu0
    %505 = vrot.lane.b32.xlu0 %v399, 32
    %v506 = vpop.permute.xlu0 %505
    %507 = vrot.lane.b32.xlu0 %v401, 32
    %v508 = vpop.permute.xlu0 %507
    %v509 = vsel %vm213, %v506, %v508
    %v511 = vadd.f32 %v501, %v509
    %v512 = vxor.u32 %v511, 2147483648
    %v513 = vmul.f32 %v512, 1.442695
    %v514 = vpow.pop %v513
    %v515 = vadd.f32 %v514, 1.0
    %v516 = vrcp.pop %v515
    %v517 = vmul.f32 1.0, %v516
    %518 = vrot.lane.b32.xlu0 %v401, 96
    %v519 = vpop.permute.xlu0 %518
    %v521 = vmul.f32 %v517, %v519
    %523 = vrot.lane.b32.xlu0 %v521, 64
    %v524 = vpop.permute.xlu0 %523
    %v526 = vadd.f32 %v501, %v524
    %v527 = vtanh.pop %v526
    %v528 = vsub.f32 1.0, %v517
    %530 = vrot.lane.b32.xlu0 %v527, 96
    %v531 = vpop.permute.xlu0 %530
    %v533 = vmul.f32 %v528, %v531
    %v534 = vmul.f32 %v517, %v317
    %v535 = vadd.f32 %v533, %v534
    %s536 = scalar_lea.vmem %s0, 4
    %v537 = vld [vmem:[%s536] sm:$0x3]
    %539 = vset.pattern.permute.xlu0 0
    %540 = vperm.xlu0 %539, %v537
    %v541 = vpop.permute.xlu0 %540
    %v543 = vmul.f32 %v541, %v82
    %v544 = vadd.f32 %v543, %v89
    %v546 = vsel %vm213, %v431, %v535
    %v548 = vsel %vm103, %v546, 0
    %550 = vmatprep.subr.mxu0 %v51
    %551 = vmatpush1.msra.mxu0 %v50
    %552 = vmatprep.subr.mxu0 %v53
    %553 = vmatpush1.msra.mxu0 %v52
    %554 = vmatprep.subr.mxu0 %v55
    %555 = vmatpush1.msra.mxu0 %v54
    %556 = vmatprep.subr.mxu0 %v57
    %557 = vmatpush1.msra.mxu0 %v56
    %558 = vmatprep.subr.mxu0 %v59
    %559 = vmatpush1.msra.mxu0 %v58
    %560 = vmatprep.subr.mxu0 %v61
    %561 = vmatpush1.msra.mxu0 %v60
    %562 = vmatprep.subr.mxu0 %v63
    %563 = vmatpush1.msra.mxu0 %v62
    %564 = vmatprep.subr.mxu0 %v65
    %565 = vmatpush1.msra.mxu0 %v64
    %566 = vmatprep.subr.mxu0 0.0
    %567 = vmatpush1.msra.mxu0 0.0
    %568 = vmatprep.subr.mxu0 0.0
    %569 = vmatpush1.msra.mxu0 0.0
    %570 = vmatprep.subr.mxu0 0.0
    %571 = vmatpush1.msra.mxu0 0.0
    %572 = vmatprep.subr.mxu0 0.0
    %573 = vmatpush1.msra.mxu0 0.0
    %574 = vmatprep.subr.mxu0 0.0
    %575 = vmatpush1.msra.mxu0 0.0
    %576 = vmatprep.subr.mxu0 0.0
    %577 = vmatpush1.msra.mxu0 0.0
    %578 = vmatprep.subr.mxu0 0.0
    %579 = vmatpush1.msra.mxu0 0.0
    %580 = vmatprep.subr.mxu0 0.0
    %581 = vmatpush1.msra.mxu0 0.0
    %582 = vmatprep.subr.mxu0 0.0
    %583 = vmatpush1.msra.mxu0 0.0
    %584 = vmatprep.subr.mxu0 0.0
    %585 = vmatpush1.msra.mxu0 0.0
    %586 = vmatprep.subr.mxu0 0.0
    %587 = vmatpush1.msra.mxu0 0.0
    %588 = vmatprep.subr.mxu0 0.0
    %589 = vmatpush1.msra.mxu0 0.0
    %590 = vmatprep.subr.mxu0 0.0
    %591 = vmatpush1.msra.mxu0 0.0
    %592 = vmatprep.subr.mxu0 0.0
    %593 = vmatpush1.msra.mxu0 0.0
    %594 = vmatprep.subr.mxu0 0.0
    %595 = vmatpush1.msra.mxu0 0.0
    %596 = vmatprep.subr.mxu0 0.0
    %597 = vmatpush1.msra.mxu0 0.0
    %598 = vmatprep.subr.mxu0 0.0
    %599 = vmatpush1.msra.mxu0 0.0
    %600 = vmatprep.subr.mxu0 0.0
    %601 = vmatpush1.msra.mxu0 0.0
    %602 = vmatprep.subr.mxu0 0.0
    %603 = vmatpush1.msra.mxu0 0.0
    %604 = vmatprep.subr.mxu0 0.0
    %605 = vmatpush1.msra.mxu0 0.0
    %606 = vmatprep.subr.mxu0 0.0
    %607 = vmatpush1.msra.mxu0 0.0
    %608 = vmatprep.subr.mxu0 0.0
    %609 = vmatpush1.msra.mxu0 0.0
    %610 = vmatprep.subr.mxu0 0.0
    %611 = vmatpush1.msra.mxu0 0.0
    %612 = vmatprep.subr.mxu0 0.0
    %613 = vmatpush1.msra.mxu0 0.0
    %614 = vmatprep.mubr.f32.mxu0 0.0
    %615 = vmatmul.mubr.f32.gmra.mrb[0].mxu0 %v548
    %v616 = vpop.f32.mrb[0].mxu0
    %v617 = vadd.f32 %v96, %v616
    %v618 = vpop.f32.mrb[0].mxu0
    %v619 = vadd.f32 %v100, %v618
    %620 = vdwg.mxu0
    %v621 = vadd.f32 %v544, %v617
    %v622 = vxor.u32 %v621, 2147483648
    %v623 = vmul.f32 %v622, 1.442695
    %v624 = vpow.pop %v623
    %v625 = vadd.f32 %v624, 1.0
    %v626 = vrcp.pop %v625
    %v627 = vmul.f32 1.0, %v626
    %629 = vrot.lane.b32.xlu0 %v617, 64
    %v630 = vpop.permute.xlu0 %629
    %v632 = vmul.f32 %v627, %v630
    %634 = vrot.lane.b32.xlu0 %v632, 64
    %v635 = vpop.permute.xlu0 %634
    %v637 = vadd.f32 %v544, %v635
    %v638 = vtanh.pop %v637
    %v639 = vsub.f32 1.0, %v627
    %641 = vrot.lane.b32.xlu0 %v638, 96
    %v642 = vpop.permute.xlu0 %641
    %v644 = vmul.f32 %v639, %v642
    %v645 = vmul.f32 %v627, %v428
    %v646 = vadd.f32 %v644, %v645
    %648 = vrot.lane.b32.xlu0 %v646, 96
    %v649 = vpop.permute.xlu0 %648
    %v650 = vsel %vm213, %v649, 0
    %652 = vmatprep.subr.mxu0 0.0
    %653 = vmatpush1.msra.mxu0 %v67
    %654 = vmatprep.subr.mxu0 0.0
    %655 = vmatpush1.msra.mxu0 %v68
    %656 = vmatprep.subr.mxu0 0.0
    %657 = vmatpush1.msra.mxu0 %v69
    %658 = vmatprep.subr.mxu0 0.0
    %659 = vmatpush1.msra.mxu0 %v70
    %660 = vmatprep.subr.mxu0 0.0
    %661 = vmatpush1.msra.mxu0 0.0
    %662 = vmatprep.subr.mxu0 0.0
    %663 = vmatpush1.msra.mxu0 0.0
    %664 = vmatprep.subr.mxu0 0.0
    %665 = vmatpush1.msra.mxu0 0.0
    %666 = vmatprep.subr.mxu0 0.0
    %667 = vmatpush1.msra.mxu0 0.0
    %668 = vmatprep.subr.mxu0 0.0
    %669 = vmatpush1.msra.mxu0 0.0
    %670 = vmatprep.subr.mxu0 0.0
    %671 = vmatpush1.msra.mxu0 0.0
    %672 = vmatprep.subr.mxu0 0.0
    %673 = vmatpush1.msra.mxu0 0.0
    %674 = vmatprep.subr.mxu0 0.0
    %675 = vmatpush1.msra.mxu0 0.0
    %676 = vmatprep.subr.mxu0 0.0
    %677 = vmatpush1.msra.mxu0 0.0
    %678 = vmatprep.subr.mxu0 0.0
    %679 = vmatpush1.msra.mxu0 0.0
    %680 = vmatprep.subr.mxu0 0.0
    %681 = vmatpush1.msra.mxu0 0.0
    %682 = vmatprep.subr.mxu0 0.0
    %683 = vmatpush1.msra.mxu0 0.0
    %684 = vmatprep.subr.mxu0 0.0
    %685 = vmatpush1.msra.mxu0 0.0
    %686 = vmatprep.subr.mxu0 0.0
    %687 = vmatpush1.msra.mxu0 0.0
    %688 = vmatprep.subr.mxu0 0.0
    %689 = vmatpush1.msra.mxu0 0.0
    %690 = vmatprep.subr.mxu0 0.0
    %691 = vmatpush1.msra.mxu0 0.0
    %692 = vmatprep.subr.mxu0 0.0
    %693 = vmatpush1.msra.mxu0 0.0
    %694 = vmatprep.subr.mxu0 0.0
    %695 = vmatpush1.msra.mxu0 0.0
    %696 = vmatprep.subr.mxu0 0.0
    %697 = vmatpush1.msra.mxu0 0.0
    %698 = vmatprep.subr.mxu0 0.0
    %699 = vmatpush1.msra.mxu0 0.0
    %700 = vmatprep.subr.mxu0 0.0
    %701 = vmatpush1.msra.mxu0 0.0
    %702 = vmatprep.subr.mxu0 0.0
    %703 = vmatpush1.msra.mxu0 0.0
    %704 = vmatprep.subr.mxu0 0.0
    %705 = vmatpush1.msra.mxu0 0.0
    %706 = vmatprep.subr.mxu0 0.0
    %707 = vmatpush1.msra.mxu0 0.0
    %708 = vmatprep.subr.mxu0 0.0
    %709 = vmatpush1.msra.mxu0 0.0
    %710 = vmatprep.subr.mxu0 0.0
    %711 = vmatpush1.msra.mxu0 0.0
    %712 = vmatprep.subr.mxu0 0.0
    %713 = vmatpush1.msra.mxu0 0.0
    %714 = vmatprep.subr.mxu0 0.0
    %715 = vmatpush1.msra.mxu0 0.0
    %716 = vmatprep.mubr.f32.mxu0 0.0
    %717 = vmatmul.mubr.f32.gmra.mrb[0].mxu0 %v650
    %v718 = vpop.f32.mrb[0].mxu0
    %v719 = vadd.f32 %v208, %v718
    %v720 = vpop.f32.mrb[0].mxu0
    %721 = vdwg.mxu0
    %723 = vrot.lane.b32.xlu0 %v617, 32
    %v724 = vpop.permute.xlu0 %723
    %725 = vrot.lane.b32.xlu0 %v619, 32
    %v726 = vpop.permute.xlu0 %725
    %v727 = vsel %vm213, %v724, %v726
    %v729 = vadd.f32 %v719, %v727
    %v730 = vxor.u32 %v729, 2147483648
    %v731 = vmul.f32 %v730, 1.442695
    %v732 = vpow.pop %v731
    %v733 = vadd.f32 %v732, 1.0
    %v734 = vrcp.pop %v733
    %v735 = vmul.f32 1.0, %v734
    %736 = vrot.lane.b32.xlu0 %v619, 96
    %v737 = vpop.permute.xlu0 %736
    %v739 = vmul.f32 %v735, %v737
    %741 = vrot.lane.b32.xlu0 %v739, 64
    %v742 = vpop.permute.xlu0 %741
    %v744 = vadd.f32 %v719, %v742
    %v745 = vtanh.pop %v744
    %v746 = vsub.f32 1.0, %v735
    %748 = vrot.lane.b32.xlu0 %v745, 96
    %v749 = vpop.permute.xlu0 %748
    %v751 = vmul.f32 %v746, %v749
    %v752 = vmul.f32 %v735, %v535
    %v753 = vadd.f32 %v751, %v752
    %s754 = scalar_lea.vmem %s0, 6
    %v755 = vld [vmem:[%s754] sm:$0x3]
    %757 = vset.pattern.permute.xlu0 0
    %758 = vperm.xlu0 %757, %v755
    %v759 = vpop.permute.xlu0 %758
    %v761 = vmul.f32 %v759, %v82
    %v762 = vadd.f32 %v761, %v89
    %v764 = vsel %vm213, %v649, %v753
    %v766 = vsel %vm103, %v764, 0
    %768 = vmatprep.subr.mxu0 %v51
    %769 = vmatpush1.msra.mxu0 %v50
    %770 = vmatprep.subr.mxu0 %v53
    %771 = vmatpush1.msra.mxu0 %v52
    %772 = vmatprep.subr.mxu0 %v55
    %773 = vmatpush1.msra.mxu0 %v54
    %774 = vmatprep.subr.mxu0 %v57
    %775 = vmatpush1.msra.mxu0 %v56
    %776 = vmatprep.subr.mxu0 %v59
    %777 = vmatpush1.msra.mxu0 %v58
    %778 = vmatprep.subr.mxu0 %v61
    %779 = vmatpush1.msra.mxu0 %v60
    %780 = vmatprep.subr.mxu0 %v63
    %781 = vmatpush1.msra.mxu0 %v62
    %782 = vmatprep.subr.mxu0 %v65
    %783 = vmatpush1.msra.mxu0 %v64
    %784 = vmatprep.subr.mxu0 0.0
    %785 = vmatpush1.msra.mxu0 0.0
    %786 = vmatprep.subr.mxu0 0.0
    %787 = vmatpush1.msra.mxu0 0.0
    %788 = vmatprep.subr.mxu0 0.0
    %789 = vmatpush1.msra.mxu0 0.0
    %790 = vmatprep.subr.mxu0 0.0
    %791 = vmatpush1.msra.mxu0 0.0
    %792 = vmatprep.subr.mxu0 0.0
    %793 = vmatpush1.msra.mxu0 0.0
    %794 = vmatprep.subr.mxu0 0.0
    %795 = vmatpush1.msra.mxu0 0.0
    %796 = vmatprep.subr.mxu0 0.0
    %797 = vmatpush1.msra.mxu0 0.0
    %798 = vmatprep.subr.mxu0 0.0
    %799 = vmatpush1.msra.mxu0 0.0
    %800 = vmatprep.subr.mxu0 0.0
    %801 = vmatpush1.msra.mxu0 0.0
    %802 = vmatprep.subr.mxu0 0.0
    %803 = vmatpush1.msra.mxu0 0.0
    %804 = vmatprep.subr.mxu0 0.0
    %805 = vmatpush1.msra.mxu0 0.0
    %806 = vmatprep.subr.mxu0 0.0
    %807 = vmatpush1.msra.mxu0 0.0
    %808 = vmatprep.subr.mxu0 0.0
    %809 = vmatpush1.msra.mxu0 0.0
    %810 = vmatprep.subr.mxu0 0.0
    %811 = vmatpush1.msra.mxu0 0.0
    %812 = vmatprep.subr.mxu0 0.0
    %813 = vmatpush1.msra.mxu0 0.0
    %814 = vmatprep.subr.mxu0 0.0
    %815 = vmatpush1.msra.mxu0 0.0
    %816 = vmatprep.subr.mxu0 0.0
    %817 = vmatpush1.msra.mxu0 0.0
    %818 = vmatprep.subr.mxu0 0.0
    %819 = vmatpush1.msra.mxu0 0.0
    %820 = vmatprep.subr.mxu0 0.0
    %821 = vmatpush1.msra.mxu0 0.0
    %822 = vmatprep.subr.mxu0 0.0
    %823 = vmatpush1.msra.mxu0 0.0
    %824 = vmatprep.subr.mxu0 0.0
    %825 = vmatpush1.msra.mxu0 0.0
    %826 = vmatprep.subr.mxu0 0.0
    %827 = vmatpush1.msra.mxu0 0.0
    %828 = vmatprep.subr.mxu0 0.0
    %829 = vmatpush1.msra.mxu0 0.0
    %830 = vmatprep.subr.mxu0 0.0
    %831 = vmatpush1.msra.mxu0 0.0
    %832 = vmatprep.mubr.f32.mxu0 0.0
    %833 = vmatmul.mubr.f32.gmra.mrb[0].mxu0 %v766
    %v834 = vpop.f32.mrb[0].mxu0
    %v835 = vadd.f32 %v96, %v834
    %v836 = vpop.f32.mrb[0].mxu0
    %v837 = vadd.f32 %v100, %v836
    %838 = vdwg.mxu0
    %v839 = vadd.f32 %v762, %v835
    %v840 = vxor.u32 %v839, 2147483648
    %v841 = vmul.f32 %v840, 1.442695
    %v842 = vpow.pop %v841
    %v843 = vadd.f32 %v842, 1.0
    %v844 = vrcp.pop %v843
    %v845 = vmul.f32 1.0, %v844
    %847 = vrot.lane.b32.xlu0 %v835, 64
    %v848 = vpop.permute.xlu0 %847
    %v850 = vmul.f32 %v845, %v848
    %852 = vrot.lane.b32.xlu0 %v850, 64
    %v853 = vpop.permute.xlu0 %852
    %v855 = vadd.f32 %v762, %v853
    %v856 = vtanh.pop %v855
    %v857 = vsub.f32 1.0, %v845
    %859 = vrot.lane.b32.xlu0 %v856, 96
    %v860 = vpop.permute.xlu0 %859
    %v862 = vmul.f32 %v857, %v860
    %v863 = vmul.f32 %v845, %v646
    %v864 = vadd.f32 %v862, %v863
    %866 = vrot.lane.b32.xlu0 %v864, 96
    %v867 = vpop.permute.xlu0 %866
    %v868 = vsel %vm213, %v867, 0
    %870 = vmatprep.subr.mxu0 0.0
    %871 = vmatpush1.msra.mxu0 %v67
    %872 = vmatprep.subr.mxu0 0.0
    %873 = vmatpush1.msra.mxu0 %v68
    %874 = vmatprep.subr.mxu0 0.0
    %875 = vmatpush1.msra.mxu0 %v69
    %876 = vmatprep.subr.mxu0 0.0
    %877 = vmatpush1.msra.mxu0 %v70
    %878 = vmatprep.subr.mxu0 0.0
    %879 = vmatpush1.msra.mxu0 0.0
    %880 = vmatprep.subr.mxu0 0.0
    %881 = vmatpush1.msra.mxu0 0.0
    %882 = vmatprep.subr.mxu0 0.0
    %883 = vmatpush1.msra.mxu0 0.0
    %884 = vmatprep.subr.mxu0 0.0
    %885 = vmatpush1.msra.mxu0 0.0
    %886 = vmatprep.subr.mxu0 0.0
    %887 = vmatpush1.msra.mxu0 0.0
    %888 = vmatprep.subr.mxu0 0.0
    %889 = vmatpush1.msra.mxu0 0.0
    %890 = vmatprep.subr.mxu0 0.0
    %891 = vmatpush1.msra.mxu0 0.0
    %892 = vmatprep.subr.mxu0 0.0
    %893 = vmatpush1.msra.mxu0 0.0
    %894 = vmatprep.subr.mxu0 0.0
    %895 = vmatpush1.msra.mxu0 0.0
    %896 = vmatprep.subr.mxu0 0.0
    %897 = vmatpush1.msra.mxu0 0.0
    %898 = vmatprep.subr.mxu0 0.0
    %899 = vmatpush1.msra.mxu0 0.0
    %900 = vmatprep.subr.mxu0 0.0
    %901 = vmatpush1.msra.mxu0 0.0
    %902 = vmatprep.subr.mxu0 0.0
    %903 = vmatpush1.msra.mxu0 0.0
    %904 = vmatprep.subr.mxu0 0.0
    %905 = vmatpush1.msra.mxu0 0.0
    %906 = vmatprep.subr.mxu0 0.0
    %907 = vmatpush1.msra.mxu0 0.0
    %908 = vmatprep.subr.mxu0 0.0
    %909 = vmatpush1.msra.mxu0 0.0
    %910 = vmatprep.subr.mxu0 0.0
    %911 = vmatpush1.msra.mxu0 0.0
    %912 = vmatprep.subr.mxu0 0.0
    %913 = vmatpush1.msra.mxu0 0.0
    %914 = vmatprep.subr.mxu0 0.0
    %915 = vmatpush1.msra.mxu0 0.0
    %916 = vmatprep.subr.mxu0 0.0
    %917 = vmatpush1.msra.mxu0 0.0
    %918 = vmatprep.subr.mxu0 0.0
    %919 = vmatpush1.msra.mxu0 0.0
    %920 = vmatprep.subr.mxu0 0.0
    %921 = vmatpush1.msra.mxu0 0.0
    %922 = vmatprep.subr.mxu0 0.0
    %923 = vmatpush1.msra.mxu0 0.0
    %924 = vmatprep.subr.mxu0 0.0
    %925 = vmatpush1.msra.mxu0 0.0
    %926 = vmatprep.subr.mxu0 0.0
    %927 = vmatpush1.msra.mxu0 0.0
    %928 = vmatprep.subr.mxu0 0.0
    %929 = vmatpush1.msra.mxu0 0.0
    %930 = vmatprep.subr.mxu0 0.0
    %931 = vmatpush1.msra.mxu0 0.0
    %932 = vmatprep.subr.mxu0 0.0
    %933 = vmatpush1.msra.mxu0 0.0
    %934 = vmatprep.mubr.f32.mxu0 0.0
    %935 = vmatmul.mubr.f32.gmra.mrb[0].mxu0 %v868
    %v936 = vpop.f32.mrb[0].mxu0
    %v937 = vadd.f32 %v208, %v936
    %v938 = vpop.f32.mrb[0].mxu0
    %939 = vdwg.mxu0
    %941 = vrot.lane.b32.xlu0 %v835, 32
    %v942 = vpop.permute.xlu0 %941
    %943 = vrot.lane.b32.xlu0 %v837, 32
    %v944 = vpop.permute.xlu0 %943
    %v945 = vsel %vm213, %v942, %v944
    %v947 = vadd.f32 %v937, %v945
    %v948 = vxor.u32 %v947, 2147483648
    %v949 = vmul.f32 %v948, 1.442695
    %v950 = vpow.pop %v949
    %v951 = vadd.f32 %v950, 1.0
    %v952 = vrcp.pop %v951
    %v953 = vmul.f32 1.0, %v952
    %954 = vrot.lane.b32.xlu0 %v837, 96
    %v955 = vpop.permute.xlu0 %954
    %v957 = vmul.f32 %v953, %v955
    %959 = vrot.lane.b32.xlu0 %v957, 64
    %v960 = vpop.permute.xlu0 %959
    %v962 = vadd.f32 %v937, %v960
    %v963 = vtanh.pop %v962
    %v964 = vsub.f32 1.0, %v953
    %966 = vrot.lane.b32.xlu0 %v963, 96
    %v967 = vpop.permute.xlu0 %966
    %v969 = vmul.f32 %v964, %v967
    %v970 = vmul.f32 %v953, %v753
    %v971 = vadd.f32 %v969, %v970
    %s972 = scalar_lea.vmem %s0, 8
    %v973 = vld [vmem:[%s972] sm:$0x3]
    %975 = vset.pattern.permute.xlu0 0
    %976 = vperm.xlu0 %975, %v973
    %v977 = vpop.permute.xlu0 %976
    %v979 = vmul.f32 %v977, %v82
    %v980 = vadd.f32 %v979, %v89
    %v982 = vsel %vm213, %v867, %v971
    %v984 = vsel %vm103, %v982, 0
    %986 = vmatprep.subr.mxu0 %v51
    %987 = vmatpush1.msra.mxu0 %v50
    %988 = vmatprep.subr.mxu0 %v53
    %989 = vmatpush1.msra.mxu0 %v52
    %990 = vmatprep.subr.mxu0 %v55
    %991 = vmatpush1.msra.mxu0 %v54
    %992 = vmatprep.subr.mxu0 %v57
    %993 = vmatpush1.msra.mxu0 %v56
    %994 = vmatprep.subr.mxu0 %v59
    %995 = vmatpush1.msra.mxu0 %v58
    %996 = vmatprep.subr.mxu0 %v61
    %997 = vmatpush1.msra.mxu0 %v60
    %998 = vmatprep.subr.mxu0 %v63
    %999 = vmatpush1.msra.mxu0 %v62
    %1000 = vmatprep.subr.mxu0 %v65
    %1001 = vmatpush1.msra.mxu0 %v64
    %1002 = vmatprep.subr.mxu0 0.0
    %1003 = vmatpush1.msra.mxu0 0.0
    %1004 = vmatprep.subr.mxu0 0.0
    %1005 = vmatpush1.msra.mxu0 0.0
    %1006 = vmatprep.subr.mxu0 0.0
    %1007 = vmatpush1.msra.mxu0 0.0
    %1008 = vmatprep.subr.mxu0 0.0
    %1009 = vmatpush1.msra.mxu0 0.0
    %1010 = vmatprep.subr.mxu0 0.0
    %1011 = vmatpush1.msra.mxu0 0.0
    %1012 = vmatprep.subr.mxu0 0.0
    %1013 = vmatpush1.msra.mxu0 0.0
    %1014 = vmatprep.subr.mxu0 0.0
    %1015 = vmatpush1.msra.mxu0 0.0
    %1016 = vmatprep.subr.mxu0 0.0
    %1017 = vmatpush1.msra.mxu0 0.0
    %1018 = vmatprep.subr.mxu0 0.0
    %1019 = vmatpush1.msra.mxu0 0.0
    %1020 = vmatprep.subr.mxu0 0.0
    %1021 = vmatpush1.msra.mxu0 0.0
    %1022 = vmatprep.subr.mxu0 0.0
    %1023 = vmatpush1.msra.mxu0 0.0
    %1024 = vmatprep.subr.mxu0 0.0
    %1025 = vmatpush1.msra.mxu0 0.0
    %1026 = vmatprep.subr.mxu0 0.0
    %1027 = vmatpush1.msra.mxu0 0.0
    %1028 = vmatprep.subr.mxu0 0.0
    %1029 = vmatpush1.msra.mxu0 0.0
    %1030 = vmatprep.subr.mxu0 0.0
    %1031 = vmatpush1.msra.mxu0 0.0
    %1032 = vmatprep.subr.mxu0 0.0
    %1033 = vmatpush1.msra.mxu0 0.0
    %1034 = vmatprep.subr.mxu0 0.0
    %1035 = vmatpush1.msra.mxu0 0.0
    %1036 = vmatprep.subr.mxu0 0.0
    %1037 = vmatpush1.msra.mxu0 0.0
    %1038 = vmatprep.subr.mxu0 0.0
    %1039 = vmatpush1.msra.mxu0 0.0
    %1040 = vmatprep.subr.mxu0 0.0
    %1041 = vmatpush1.msra.mxu0 0.0
    %1042 = vmatprep.subr.mxu0 0.0
    %1043 = vmatpush1.msra.mxu0 0.0
    %1044 = vmatprep.subr.mxu0 0.0
    %1045 = vmatpush1.msra.mxu0 0.0
    %1046 = vmatprep.subr.mxu0 0.0
    %1047 = vmatpush1.msra.mxu0 0.0
    %1048 = vmatprep.subr.mxu0 0.0
    %1049 = vmatpush1.msra.mxu0 0.0
    %1050 = vmatprep.mubr.f32.mxu0 0.0
    %1051 = vmatmul.mubr.f32.gmra.mrb[0].mxu0 %v984
    %v1052 = vpop.f32.mrb[0].mxu0
    %v1053 = vadd.f32 %v96, %v1052
    %v1054 = vpop.f32.mrb[0].mxu0
    %v1055 = vadd.f32 %v100, %v1054
    %1056 = vdwg.mxu0
    %v1057 = vadd.f32 %v980, %v1053
    %v1058 = vxor.u32 %v1057, 2147483648
    %v1059 = vmul.f32 %v1058, 1.442695
    %v1060 = vpow.pop %v1059
    %v1061 = vadd.f32 %v1060, 1.0
    %v1062 = vrcp.pop %v1061
    %v1063 = vmul.f32 1.0, %v1062
    %1065 = vrot.lane.b32.xlu0 %v1053, 64
    %v1066 = vpop.permute.xlu0 %1065
    %v1068 = vmul.f32 %v1063, %v1066
    %1070 = vrot.lane.b32.xlu0 %v1068, 64
    %v1071 = vpop.permute.xlu0 %1070
    %v1073 = vadd.f32 %v980, %v1071
    %v1074 = vtanh.pop %v1073
    %v1075 = vsub.f32 1.0, %v1063
    %1077 = vrot.lane.b32.xlu0 %v1074, 96
    %v1078 = vpop.permute.xlu0 %1077
    %v1080 = vmul.f32 %v1075, %v1078
    %v1081 = vmul.f32 %v1063, %v864
    %v1082 = vadd.f32 %v1080, %v1081
    %1084 = vrot.lane.b32.xlu0 %v1082, 96
    %v1085 = vpop.permute.xlu0 %1084
    %v1086 = vsel %vm213, %v1085, 0
    %1088 = vmatprep.subr.mxu0 0.0
    %1089 = vmatpush1.msra.mxu0 %v67
    %1090 = vmatprep.subr.mxu0 0.0
    %1091 = vmatpush1.msra.mxu0 %v68
    %1092 = vmatprep.subr.mxu0 0.0
    %1093 = vmatpush1.msra.mxu0 %v69
    %1094 = vmatprep.subr.mxu0 0.0
    %1095 = vmatpush1.msra.mxu0 %v70
    %1096 = vmatprep.subr.mxu0 0.0
    %1097 = vmatpush1.msra.mxu0 0.0
    %1098 = vmatprep.subr.mxu0 0.0
    %1099 = vmatpush1.msra.mxu0 0.0
    %1100 = vmatprep.subr.mxu0 0.0
    %1101 = vmatpush1.msra.mxu0 0.0
    %1102 = vmatprep.subr.mxu0 0.0
    %1103 = vmatpush1.msra.mxu0 0.0
    %1104 = vmatprep.subr.mxu0 0.0
    %1105 = vmatpush1.msra.mxu0 0.0
    %1106 = vmatprep.subr.mxu0 0.0
    %1107 = vmatpush1.msra.mxu0 0.0
    %1108 = vmatprep.subr.mxu0 0.0
    %1109 = vmatpush1.msra.mxu0 0.0
    %1110 = vmatprep.subr.mxu0 0.0
    %1111 = vmatpush1.msra.mxu0 0.0
    %1112 = vmatprep.subr.mxu0 0.0
    %1113 = vmatpush1.msra.mxu0 0.0
    %1114 = vmatprep.subr.mxu0 0.0
    %1115 = vmatpush1.msra.mxu0 0.0
    %1116 = vmatprep.subr.mxu0 0.0
    %1117 = vmatpush1.msra.mxu0 0.0
    %1118 = vmatprep.subr.mxu0 0.0
    %1119 = vmatpush1.msra.mxu0 0.0
    %1120 = vmatprep.subr.mxu0 0.0
    %1121 = vmatpush1.msra.mxu0 0.0
    %1122 = vmatprep.subr.mxu0 0.0
    %1123 = vmatpush1.msra.mxu0 0.0
    %1124 = vmatprep.subr.mxu0 0.0
    %1125 = vmatpush1.msra.mxu0 0.0
    %1126 = vmatprep.subr.mxu0 0.0
    %1127 = vmatpush1.msra.mxu0 0.0
    %1128 = vmatprep.subr.mxu0 0.0
    %1129 = vmatpush1.msra.mxu0 0.0
    %1130 = vmatprep.subr.mxu0 0.0
    %1131 = vmatpush1.msra.mxu0 0.0
    %1132 = vmatprep.subr.mxu0 0.0
    %1133 = vmatpush1.msra.mxu0 0.0
    %1134 = vmatprep.subr.mxu0 0.0
    %1135 = vmatpush1.msra.mxu0 0.0
    %1136 = vmatprep.subr.mxu0 0.0
    %1137 = vmatpush1.msra.mxu0 0.0
    %1138 = vmatprep.subr.mxu0 0.0
    %1139 = vmatpush1.msra.mxu0 0.0
    %1140 = vmatprep.subr.mxu0 0.0
    %1141 = vmatpush1.msra.mxu0 0.0
    %1142 = vmatprep.subr.mxu0 0.0
    %1143 = vmatpush1.msra.mxu0 0.0
    %1144 = vmatprep.subr.mxu0 0.0
    %1145 = vmatpush1.msra.mxu0 0.0
    %1146 = vmatprep.subr.mxu0 0.0
    %1147 = vmatpush1.msra.mxu0 0.0
    %1148 = vmatprep.subr.mxu0 0.0
    %1149 = vmatpush1.msra.mxu0 0.0
    %1150 = vmatprep.subr.mxu0 0.0
    %1151 = vmatpush1.msra.mxu0 0.0
    %1152 = vmatprep.mubr.f32.mxu0 0.0
    %1153 = vmatmul.mubr.f32.gmra.mrb[0].mxu0 %v1086
    %v1154 = vpop.f32.mrb[0].mxu0
    %v1155 = vadd.f32 %v208, %v1154
    %v1156 = vpop.f32.mrb[0].mxu0
    %1157 = vdwg.mxu0
    %1159 = vrot.lane.b32.xlu0 %v1053, 32
    %v1160 = vpop.permute.xlu0 %1159
    %1161 = vrot.lane.b32.xlu0 %v1055, 32
    %v1162 = vpop.permute.xlu0 %1161
    %v1163 = vsel %vm213, %v1160, %v1162
    %v1165 = vadd.f32 %v1155, %v1163
    %v1166 = vxor.u32 %v1165, 2147483648
    %v1167 = vmul.f32 %v1166, 1.442695
    %v1168 = vpow.pop %v1167
    %v1169 = vadd.f32 %v1168, 1.0
    %v1170 = vrcp.pop %v1169
    %v1171 = vmul.f32 1.0, %v1170
    %1172 = vrot.lane.b32.xlu0 %v1055, 96
    %v1173 = vpop.permute.xlu0 %1172
    %v1175 = vmul.f32 %v1171, %v1173
    %1177 = vrot.lane.b32.xlu0 %v1175, 64
    %v1178 = vpop.permute.xlu0 %1177
    %v1180 = vadd.f32 %v1155, %v1178
    %v1181 = vtanh.pop %v1180
    %v1182 = vsub.f32 1.0, %v1171
    %1184 = vrot.lane.b32.xlu0 %v1181, 96
    %v1185 = vpop.permute.xlu0 %1184
    %v1187 = vmul.f32 %v1182, %v1185
    %v1188 = vmul.f32 %v1171, %v971
    %v1189 = vadd.f32 %v1187, %v1188
    %s1190 = scalar_lea.vmem %s0, 10
    %v1191 = vld [vmem:[%s1190] sm:$0x3]
    %1193 = vset.pattern.permute.xlu0 0
    %1194 = vperm.xlu0 %1193, %v1191
    %v1195 = vpop.permute.xlu0 %1194
    %v1197 = vmul.f32 %v1195, %v82
    %v1198 = vadd.f32 %v1197, %v89
    %v1200 = vsel %vm213, %v1085, %v1189
    %v1202 = vsel %vm103, %v1200, 0
    %1204 = vmatprep.subr.mxu0 %v51
    %1205 = vmatpush1.msra.mxu0 %v50
    %1206 = vmatprep.subr.mxu0 %v53
    %1207 = vmatpush1.msra.mxu0 %v52
    %1208 = vmatprep.subr.mxu0 %v55
    %1209 = vmatpush1.msra.mxu0 %v54
    %1210 = vmatprep.subr.mxu0 %v57
    %1211 = vmatpush1.msra.mxu0 %v56
    %1212 = vmatprep.subr.mxu0 %v59
    %1213 = vmatpush1.msra.mxu0 %v58
    %1214 = vmatprep.subr.mxu0 %v61
    %1215 = vmatpush1.msra.mxu0 %v60
    %1216 = vmatprep.subr.mxu0 %v63
    %1217 = vmatpush1.msra.mxu0 %v62
    %1218 = vmatprep.subr.mxu0 %v65
    %1219 = vmatpush1.msra.mxu0 %v64
    %1220 = vmatprep.subr.mxu0 0.0
    %1221 = vmatpush1.msra.mxu0 0.0
    %1222 = vmatprep.subr.mxu0 0.0
    %1223 = vmatpush1.msra.mxu0 0.0
    %1224 = vmatprep.subr.mxu0 0.0
    %1225 = vmatpush1.msra.mxu0 0.0
    %1226 = vmatprep.subr.mxu0 0.0
    %1227 = vmatpush1.msra.mxu0 0.0
    %1228 = vmatprep.subr.mxu0 0.0
    %1229 = vmatpush1.msra.mxu0 0.0
    %1230 = vmatprep.subr.mxu0 0.0
    %1231 = vmatpush1.msra.mxu0 0.0
    %1232 = vmatprep.subr.mxu0 0.0
    %1233 = vmatpush1.msra.mxu0 0.0
    %1234 = vmatprep.subr.mxu0 0.0
    %1235 = vmatpush1.msra.mxu0 0.0
    %1236 = vmatprep.subr.mxu0 0.0
    %1237 = vmatpush1.msra.mxu0 0.0
    %1238 = vmatprep.subr.mxu0 0.0
    %1239 = vmatpush1.msra.mxu0 0.0
    %1240 = vmatprep.subr.mxu0 0.0
    %1241 = vmatpush1.msra.mxu0 0.0
    %1242 = vmatprep.subr.mxu0 0.0
    %1243 = vmatpush1.msra.mxu0 0.0
    %1244 = vmatprep.subr.mxu0 0.0
    %1245 = vmatpush1.msra.mxu0 0.0
    %1246 = vmatprep.subr.mxu0 0.0
    %1247 = vmatpush1.msra.mxu0 0.0
    %1248 = vmatprep.subr.mxu0 0.0
    %1249 = vmatpush1.msra.mxu0 0.0
    %1250 = vmatprep.subr.mxu0 0.0
    %1251 = vmatpush1.msra.mxu0 0.0
    %1252 = vmatprep.subr.mxu0 0.0
    %1253 = vmatpush1.msra.mxu0 0.0
    %1254 = vmatprep.subr.mxu0 0.0
    %1255 = vmatpush1.msra.mxu0 0.0
    %1256 = vmatprep.subr.mxu0 0.0
    %1257 = vmatpush1.msra.mxu0 0.0
    %1258 = vmatprep.subr.mxu0 0.0
    %1259 = vmatpush1.msra.mxu0 0.0
    %1260 = vmatprep.subr.mxu0 0.0
    %1261 = vmatpush1.msra.mxu0 0.0
    %1262 = vmatprep.subr.mxu0 0.0
    %1263 = vmatpush1.msra.mxu0 0.0
    %1264 = vmatprep.subr.mxu0 0.0
    %1265 = vmatpush1.msra.mxu0 0.0
    %1266 = vmatprep.subr.mxu0 0.0
    %1267 = vmatpush1.msra.mxu0 0.0
    %1268 = vmatprep.mubr.f32.mxu0 0.0
    %1269 = vmatmul.mubr.f32.gmra.mrb[0].mxu0 %v1202
    %v1270 = vpop.f32.mrb[0].mxu0
    %v1271 = vadd.f32 %v96, %v1270
    %v1272 = vpop.f32.mrb[0].mxu0
    %v1273 = vadd.f32 %v100, %v1272
    %1274 = vdwg.mxu0
    %v1275 = vadd.f32 %v1198, %v1271
    %v1276 = vxor.u32 %v1275, 2147483648
    %v1277 = vmul.f32 %v1276, 1.442695
    %v1278 = vpow.pop %v1277
    %v1279 = vadd.f32 %v1278, 1.0
    %v1280 = vrcp.pop %v1279
    %v1281 = vmul.f32 1.0, %v1280
    %1283 = vrot.lane.b32.xlu0 %v1271, 64
    %v1284 = vpop.permute.xlu0 %1283
    %v1286 = vmul.f32 %v1281, %v1284
    %1288 = vrot.lane.b32.xlu0 %v1286, 64
    %v1289 = vpop.permute.xlu0 %1288
    %v1291 = vadd.f32 %v1198, %v1289
    %v1292 = vtanh.pop %v1291
    %v1293 = vsub.f32 1.0, %v1281
    %1295 = vrot.lane.b32.xlu0 %v1292, 96
    %v1296 = vpop.permute.xlu0 %1295
    %v1298 = vmul.f32 %v1293, %v1296
    %v1299 = vmul.f32 %v1281, %v1082
    %v1300 = vadd.f32 %v1298, %v1299
    %1302 = vrot.lane.b32.xlu0 %v1300, 96
    %v1303 = vpop.permute.xlu0 %1302
    %v1304 = vsel %vm213, %v1303, 0
    %1306 = vmatprep.subr.mxu0 0.0
    %1307 = vmatpush1.msra.mxu0 %v67
    %1308 = vmatprep.subr.mxu0 0.0
    %1309 = vmatpush1.msra.mxu0 %v68
    %1310 = vmatprep.subr.mxu0 0.0
    %1311 = vmatpush1.msra.mxu0 %v69
    %1312 = vmatprep.subr.mxu0 0.0
    %1313 = vmatpush1.msra.mxu0 %v70
    %1314 = vmatprep.subr.mxu0 0.0
    %1315 = vmatpush1.msra.mxu0 0.0
    %1316 = vmatprep.subr.mxu0 0.0
    %1317 = vmatpush1.msra.mxu0 0.0
    %1318 = vmatprep.subr.mxu0 0.0
    %1319 = vmatpush1.msra.mxu0 0.0
    %1320 = vmatprep.subr.mxu0 0.0
    %1321 = vmatpush1.msra.mxu0 0.0
    %1322 = vmatprep.subr.mxu0 0.0
    %1323 = vmatpush1.msra.mxu0 0.0
    %1324 = vmatprep.subr.mxu0 0.0
    %1325 = vmatpush1.msra.mxu0 0.0
    %1326 = vmatprep.subr.mxu0 0.0
    %1327 = vmatpush1.msra.mxu0 0.0
    %1328 = vmatprep.subr.mxu0 0.0
    %1329 = vmatpush1.msra.mxu0 0.0
    %1330 = vmatprep.subr.mxu0 0.0
    %1331 = vmatpush1.msra.mxu0 0.0
    %1332 = vmatprep.subr.mxu0 0.0
    %1333 = vmatpush1.msra.mxu0 0.0
    %1334 = vmatprep.subr.mxu0 0.0
    %1335 = vmatpush1.msra.mxu0 0.0
    %1336 = vmatprep.subr.mxu0 0.0
    %1337 = vmatpush1.msra.mxu0 0.0
    %1338 = vmatprep.subr.mxu0 0.0
    %1339 = vmatpush1.msra.mxu0 0.0
    %1340 = vmatprep.subr.mxu0 0.0
    %1341 = vmatpush1.msra.mxu0 0.0
    %1342 = vmatprep.subr.mxu0 0.0
    %1343 = vmatpush1.msra.mxu0 0.0
    %1344 = vmatprep.subr.mxu0 0.0
    %1345 = vmatpush1.msra.mxu0 0.0
    %1346 = vmatprep.subr.mxu0 0.0
    %1347 = vmatpush1.msra.mxu0 0.0
    %1348 = vmatprep.subr.mxu0 0.0
    %1349 = vmatpush1.msra.mxu0 0.0
    %1350 = vmatprep.subr.mxu0 0.0
    %1351 = vmatpush1.msra.mxu0 0.0
    %1352 = vmatprep.subr.mxu0 0.0
    %1353 = vmatpush1.msra.mxu0 0.0
    %1354 = vmatprep.subr.mxu0 0.0
    %1355 = vmatpush1.msra.mxu0 0.0
    %1356 = vmatprep.subr.mxu0 0.0
    %1357 = vmatpush1.msra.mxu0 0.0
    %1358 = vmatprep.subr.mxu0 0.0
    %1359 = vmatpush1.msra.mxu0 0.0
    %1360 = vmatprep.subr.mxu0 0.0
    %1361 = vmatpush1.msra.mxu0 0.0
    %1362 = vmatprep.subr.mxu0 0.0
    %1363 = vmatpush1.msra.mxu0 0.0
    %1364 = vmatprep.subr.mxu0 0.0
    %1365 = vmatpush1.msra.mxu0 0.0
    %1366 = vmatprep.subr.mxu0 0.0
    %1367 = vmatpush1.msra.mxu0 0.0
    %1368 = vmatprep.subr.mxu0 0.0
    %1369 = vmatpush1.msra.mxu0 0.0
    %1370 = vmatprep.mubr.f32.mxu0 0.0
    %1371 = vmatmul.mubr.f32.gmra.mrb[0].mxu0 %v1304
    %v1372 = vpop.f32.mrb[0].mxu0
    %v1373 = vadd.f32 %v208, %v1372
    %v1374 = vpop.f32.mrb[0].mxu0
    %1375 = vdwg.mxu0
    %1377 = vrot.lane.b32.xlu0 %v1271, 32
    %v1378 = vpop.permute.xlu0 %1377
    %1379 = vrot.lane.b32.xlu0 %v1273, 32
    %v1380 = vpop.permute.xlu0 %1379
    %v1381 = vsel %vm213, %v1378, %v1380
    %v1383 = vadd.f32 %v1373, %v1381
    %v1384 = vxor.u32 %v1383, 2147483648
    %v1385 = vmul.f32 %v1384, 1.442695
    %v1386 = vpow.pop %v1385
    %v1387 = vadd.f32 %v1386, 1.0
    %v1388 = vrcp.pop %v1387
    %v1389 = vmul.f32 1.0, %v1388
    %1390 = vrot.lane.b32.xlu0 %v1273, 96
    %v1391 = vpop.permute.xlu0 %1390
    %v1393 = vmul.f32 %v1389, %v1391
    %1395 = vrot.lane.b32.xlu0 %v1393, 64
    %v1396 = vpop.permute.xlu0 %1395
    %v1398 = vadd.f32 %v1373, %v1396
    %v1399 = vtanh.pop %v1398
    %v1400 = vsub.f32 1.0, %v1389
    %1402 = vrot.lane.b32.xlu0 %v1399, 96
    %v1403 = vpop.permute.xlu0 %1402
    %v1405 = vmul.f32 %v1400, %v1403
    %v1406 = vmul.f32 %v1389, %v1189
    %v1407 = vadd.f32 %v1405, %v1406
    %s1408 = scalar_lea.vmem %s0, 12
    %v1409 = vld [vmem:[%s1408] sm:$0x3]
    %1411 = vset.pattern.permute.xlu0 0
    %1412 = vperm.xlu0 %1411, %v1409
    %v1413 = vpop.permute.xlu0 %1412
    %v1415 = vmul.f32 %v1413, %v82
    %v1416 = vadd.f32 %v1415, %v89
    %v1418 = vsel %vm213, %v1303, %v1407
    %v1420 = vsel %vm103, %v1418, 0
    %1422 = vmatprep.subr.mxu0 %v51
    %1423 = vmatpush1.msra.mxu0 %v50
    %1424 = vmatprep.subr.mxu0 %v53
    %1425 = vmatpush1.msra.mxu0 %v52
    %1426 = vmatprep.subr.mxu0 %v55
    %1427 = vmatpush1.msra.mxu0 %v54
    %1428 = vmatprep.subr.mxu0 %v57
    %1429 = vmatpush1.msra.mxu0 %v56
    %1430 = vmatprep.subr.mxu0 %v59
    %1431 = vmatpush1.msra.mxu0 %v58
    %1432 = vmatprep.subr.mxu0 %v61
    %1433 = vmatpush1.msra.mxu0 %v60
    %1434 = vmatprep.subr.mxu0 %v63
    %1435 = vmatpush1.msra.mxu0 %v62
    %1436 = vmatprep.subr.mxu0 %v65
    %1437 = vmatpush1.msra.mxu0 %v64
    %1438 = vmatprep.subr.mxu0 0.0
    %1439 = vmatpush1.msra.mxu0 0.0
    %1440 = vmatprep.subr.mxu0 0.0
    %1441 = vmatpush1.msra.mxu0 0.0
    %1442 = vmatprep.subr.mxu0 0.0
    %1443 = vmatpush1.msra.mxu0 0.0
    %1444 = vmatprep.subr.mxu0 0.0
    %1445 = vmatpush1.msra.mxu0 0.0
    %1446 = vmatprep.subr.mxu0 0.0
    %1447 = vmatpush1.msra.mxu0 0.0
    %1448 = vmatprep.subr.mxu0 0.0
    %1449 = vmatpush1.msra.mxu0 0.0
    %1450 = vmatprep.subr.mxu0 0.0
    %1451 = vmatpush1.msra.mxu0 0.0
    %1452 = vmatprep.subr.mxu0 0.0
    %1453 = vmatpush1.msra.mxu0 0.0
    %1454 = vmatprep.subr.mxu0 0.0
    %1455 = vmatpush1.msra.mxu0 0.0
    %1456 = vmatprep.subr.mxu0 0.0
    %1457 = vmatpush1.msra.mxu0 0.0
    %1458 = vmatprep.subr.mxu0 0.0
    %1459 = vmatpush1.msra.mxu0 0.0
    %1460 = vmatprep.subr.mxu0 0.0
    %1461 = vmatpush1.msra.mxu0 0.0
    %1462 = vmatprep.subr.mxu0 0.0
    %1463 = vmatpush1.msra.mxu0 0.0
    %1464 = vmatprep.subr.mxu0 0.0
    %1465 = vmatpush1.msra.mxu0 0.0
    %1466 = vmatprep.subr.mxu0 0.0
    %1467 = vmatpush1.msra.mxu0 0.0
    %1468 = vmatprep.subr.mxu0 0.0
    %1469 = vmatpush1.msra.mxu0 0.0
    %1470 = vmatprep.subr.mxu0 0.0
    %1471 = vmatpush1.msra.mxu0 0.0
    %1472 = vmatprep.subr.mxu0 0.0
    %1473 = vmatpush1.msra.mxu0 0.0
    %1474 = vmatprep.subr.mxu0 0.0
    %1475 = vmatpush1.msra.mxu0 0.0
    %1476 = vmatprep.subr.mxu0 0.0
    %1477 = vmatpush1.msra.mxu0 0.0
    %1478 = vmatprep.subr.mxu0 0.0
    %1479 = vmatpush1.msra.mxu0 0.0
    %1480 = vmatprep.subr.mxu0 0.0
    %1481 = vmatpush1.msra.mxu0 0.0
    %1482 = vmatprep.subr.mxu0 0.0
    %1483 = vmatpush1.msra.mxu0 0.0
    %1484 = vmatprep.subr.mxu0 0.0
    %1485 = vmatpush1.msra.mxu0 0.0
    %1486 = vmatprep.mubr.f32.mxu0 0.0
    %1487 = vmatmul.mubr.f32.gmra.mrb[0].mxu0 %v1420
    %v1488 = vpop.f32.mrb[0].mxu0
    %v1489 = vadd.f32 %v96, %v1488
    %v1490 = vpop.f32.mrb[0].mxu0
    %v1491 = vadd.f32 %v100, %v1490
    %1492 = vdwg.mxu0
    %v1493 = vadd.f32 %v1416, %v1489
    %v1494 = vxor.u32 %v1493, 2147483648
    %v1495 = vmul.f32 %v1494, 1.442695
    %v1496 = vpow.pop %v1495
    %v1497 = vadd.f32 %v1496, 1.0
    %v1498 = vrcp.pop %v1497
    %v1499 = vmul.f32 1.0, %v1498
    %1501 = vrot.lane.b32.xlu0 %v1489, 64
    %v1502 = vpop.permute.xlu0 %1501
    %v1504 = vmul.f32 %v1499, %v1502
    %1506 = vrot.lane.b32.xlu0 %v1504, 64
    %v1507 = vpop.permute.xlu0 %1506
    %v1509 = vadd.f32 %v1416, %v1507
    %v1510 = vtanh.pop %v1509
    %v1511 = vsub.f32 1.0, %v1499
    %1513 = vrot.lane.b32.xlu0 %v1510, 96
    %v1514 = vpop.permute.xlu0 %1513
    %v1516 = vmul.f32 %v1511, %v1514
    %v1517 = vmul.f32 %v1499, %v1300
    %v1518 = vadd.f32 %v1516, %v1517
    %1520 = vrot.lane.b32.xlu0 %v1518, 96
    %v1521 = vpop.permute.xlu0 %1520
    %v1522 = vsel %vm213, %v1521, 0
    %1524 = vmatprep.subr.mxu0 0.0
    %1525 = vmatpush1.msra.mxu0 %v67
    %1526 = vmatprep.subr.mxu0 0.0
    %1527 = vmatpush1.msra.mxu0 %v68
    %1528 = vmatprep.subr.mxu0 0.0
    %1529 = vmatpush1.msra.mxu0 %v69
    %1530 = vmatprep.subr.mxu0 0.0
    %1531 = vmatpush1.msra.mxu0 %v70
    %1532 = vmatprep.subr.mxu0 0.0
    %1533 = vmatpush1.msra.mxu0 0.0
    %1534 = vmatprep.subr.mxu0 0.0
    %1535 = vmatpush1.msra.mxu0 0.0
    %1536 = vmatprep.subr.mxu0 0.0
    %1537 = vmatpush1.msra.mxu0 0.0
    %1538 = vmatprep.subr.mxu0 0.0
    %1539 = vmatpush1.msra.mxu0 0.0
    %1540 = vmatprep.subr.mxu0 0.0
    %1541 = vmatpush1.msra.mxu0 0.0
    %1542 = vmatprep.subr.mxu0 0.0
    %1543 = vmatpush1.msra.mxu0 0.0
    %1544 = vmatprep.subr.mxu0 0.0
    %1545 = vmatpush1.msra.mxu0 0.0
    %1546 = vmatprep.subr.mxu0 0.0
    %1547 = vmatpush1.msra.mxu0 0.0
    %1548 = vmatprep.subr.mxu0 0.0
    %1549 = vmatpush1.msra.mxu0 0.0
    %1550 = vmatprep.subr.mxu0 0.0
    %1551 = vmatpush1.msra.mxu0 0.0
    %1552 = vmatprep.subr.mxu0 0.0
    %1553 = vmatpush1.msra.mxu0 0.0
    %1554 = vmatprep.subr.mxu0 0.0
    %1555 = vmatpush1.msra.mxu0 0.0
    %1556 = vmatprep.subr.mxu0 0.0
    %1557 = vmatpush1.msra.mxu0 0.0
    %1558 = vmatprep.subr.mxu0 0.0
    %1559 = vmatpush1.msra.mxu0 0.0
    %1560 = vmatprep.subr.mxu0 0.0
    %1561 = vmatpush1.msra.mxu0 0.0
    %1562 = vmatprep.subr.mxu0 0.0
    %1563 = vmatpush1.msra.mxu0 0.0
    %1564 = vmatprep.subr.mxu0 0.0
    %1565 = vmatpush1.msra.mxu0 0.0
    %1566 = vmatprep.subr.mxu0 0.0
    %1567 = vmatpush1.msra.mxu0 0.0
    %1568 = vmatprep.subr.mxu0 0.0
    %1569 = vmatpush1.msra.mxu0 0.0
    %1570 = vmatprep.subr.mxu0 0.0
    %1571 = vmatpush1.msra.mxu0 0.0
    %1572 = vmatprep.subr.mxu0 0.0
    %1573 = vmatpush1.msra.mxu0 0.0
    %1574 = vmatprep.subr.mxu0 0.0
    %1575 = vmatpush1.msra.mxu0 0.0
    %1576 = vmatprep.subr.mxu0 0.0
    %1577 = vmatpush1.msra.mxu0 0.0
    %1578 = vmatprep.subr.mxu0 0.0
    %1579 = vmatpush1.msra.mxu0 0.0
    %1580 = vmatprep.subr.mxu0 0.0
    %1581 = vmatpush1.msra.mxu0 0.0
    %1582 = vmatprep.subr.mxu0 0.0
    %1583 = vmatpush1.msra.mxu0 0.0
    %1584 = vmatprep.subr.mxu0 0.0
    %1585 = vmatpush1.msra.mxu0 0.0
    %1586 = vmatprep.subr.mxu0 0.0
    %1587 = vmatpush1.msra.mxu0 0.0
    %1588 = vmatprep.mubr.f32.mxu0 0.0
    %1589 = vmatmul.mubr.f32.gmra.mrb[0].mxu0 %v1522
    %v1590 = vpop.f32.mrb[0].mxu0
    %v1591 = vadd.f32 %v208, %v1590
    %v1592 = vpop.f32.mrb[0].mxu0
    %1593 = vdwg.mxu0
    %1595 = vrot.lane.b32.xlu0 %v1489, 32
    %v1596 = vpop.permute.xlu0 %1595
    %1597 = vrot.lane.b32.xlu0 %v1491, 32
    %v1598 = vpop.permute.xlu0 %1597
    %v1599 = vsel %vm213, %v1596, %v1598
    %v1601 = vadd.f32 %v1591, %v1599
    %v1602 = vxor.u32 %v1601, 2147483648
    %v1603 = vmul.f32 %v1602, 1.442695
    %v1604 = vpow.pop %v1603
    %v1605 = vadd.f32 %v1604, 1.0
    %v1606 = vrcp.pop %v1605
    %v1607 = vmul.f32 1.0, %v1606
    %1608 = vrot.lane.b32.xlu0 %v1491, 96
    %v1609 = vpop.permute.xlu0 %1608
    %v1611 = vmul.f32 %v1607, %v1609
    %1613 = vrot.lane.b32.xlu0 %v1611, 64
    %v1614 = vpop.permute.xlu0 %1613
    %v1616 = vadd.f32 %v1591, %v1614
    %v1617 = vtanh.pop %v1616
    %v1618 = vsub.f32 1.0, %v1607
    %1620 = vrot.lane.b32.xlu0 %v1617, 96
    %v1621 = vpop.permute.xlu0 %1620
    %v1623 = vmul.f32 %v1618, %v1621
    %v1624 = vmul.f32 %v1607, %v1407
    %v1625 = vadd.f32 %v1623, %v1624
    %s1626 = scalar_lea.vmem %s0, 14
    %v1627 = vld [vmem:[%s1626] sm:$0x3]
    %1629 = vset.pattern.permute.xlu0 0
    %1630 = vperm.xlu0 %1629, %v1627
    %v1631 = vpop.permute.xlu0 %1630
    %v1633 = vmul.f32 %v1631, %v82
    %v1634 = vadd.f32 %v1633, %v89
    %v1636 = vsel %vm213, %v1521, %v1625
    %v1638 = vsel %vm103, %v1636, 0
    %1640 = vmatprep.subr.mxu0 %v51
    %1641 = vmatpush1.msra.mxu0 %v50
    %1642 = vmatprep.subr.mxu0 %v53
    %1643 = vmatpush1.msra.mxu0 %v52
    %1644 = vmatprep.subr.mxu0 %v55
    %1645 = vmatpush1.msra.mxu0 %v54
    %1646 = vmatprep.subr.mxu0 %v57
    %1647 = vmatpush1.msra.mxu0 %v56
    %1648 = vmatprep.subr.mxu0 %v59
    %1649 = vmatpush1.msra.mxu0 %v58
    %1650 = vmatprep.subr.mxu0 %v61
    %1651 = vmatpush1.msra.mxu0 %v60
    %1652 = vmatprep.subr.mxu0 %v63
    %1653 = vmatpush1.msra.mxu0 %v62
    %1654 = vmatprep.subr.mxu0 %v65
    %1655 = vmatpush1.msra.mxu0 %v64
    %1656 = vmatprep.subr.mxu0 0.0
    %1657 = vmatpush1.msra.mxu0 0.0
    %1658 = vmatprep.subr.mxu0 0.0
    %1659 = vmatpush1.msra.mxu0 0.0
    %1660 = vmatprep.subr.mxu0 0.0
    %1661 = vmatpush1.msra.mxu0 0.0
    %1662 = vmatprep.subr.mxu0 0.0
    %1663 = vmatpush1.msra.mxu0 0.0
    %1664 = vmatprep.subr.mxu0 0.0
    %1665 = vmatpush1.msra.mxu0 0.0
    %1666 = vmatprep.subr.mxu0 0.0
    %1667 = vmatpush1.msra.mxu0 0.0
    %1668 = vmatprep.subr.mxu0 0.0
    %1669 = vmatpush1.msra.mxu0 0.0
    %1670 = vmatprep.subr.mxu0 0.0
    %1671 = vmatpush1.msra.mxu0 0.0
    %1672 = vmatprep.subr.mxu0 0.0
    %1673 = vmatpush1.msra.mxu0 0.0
    %1674 = vmatprep.subr.mxu0 0.0
    %1675 = vmatpush1.msra.mxu0 0.0
    %1676 = vmatprep.subr.mxu0 0.0
    %1677 = vmatpush1.msra.mxu0 0.0
    %1678 = vmatprep.subr.mxu0 0.0
    %1679 = vmatpush1.msra.mxu0 0.0
    %1680 = vmatprep.subr.mxu0 0.0
    %1681 = vmatpush1.msra.mxu0 0.0
    %1682 = vmatprep.subr.mxu0 0.0
    %1683 = vmatpush1.msra.mxu0 0.0
    %1684 = vmatprep.subr.mxu0 0.0
    %1685 = vmatpush1.msra.mxu0 0.0
    %1686 = vmatprep.subr.mxu0 0.0
    %1687 = vmatpush1.msra.mxu0 0.0
    %1688 = vmatprep.subr.mxu0 0.0
    %1689 = vmatpush1.msra.mxu0 0.0
    %1690 = vmatprep.subr.mxu0 0.0
    %1691 = vmatpush1.msra.mxu0 0.0
    %1692 = vmatprep.subr.mxu0 0.0
    %1693 = vmatpush1.msra.mxu0 0.0
    %1694 = vmatprep.subr.mxu0 0.0
    %1695 = vmatpush1.msra.mxu0 0.0
    %1696 = vmatprep.subr.mxu0 0.0
    %1697 = vmatpush1.msra.mxu0 0.0
    %1698 = vmatprep.subr.mxu0 0.0
    %1699 = vmatpush1.msra.mxu0 0.0
    %1700 = vmatprep.subr.mxu0 0.0
    %1701 = vmatpush1.msra.mxu0 0.0
    %1702 = vmatprep.subr.mxu0 0.0
    %1703 = vmatpush1.msra.mxu0 0.0
    %1704 = vmatprep.mubr.f32.mxu0 0.0
    %1705 = vmatmul.mubr.f32.gmra.mrb[0].mxu0 %v1638
    %v1706 = vpop.f32.mrb[0].mxu0
    %v1707 = vadd.f32 %v96, %v1706
    %v1708 = vpop.f32.mrb[0].mxu0
    %v1709 = vadd.f32 %v100, %v1708
    %1710 = vdwg.mxu0
    %v1711 = vadd.f32 %v1634, %v1707
    %v1712 = vxor.u32 %v1711, 2147483648
    %v1713 = vmul.f32 %v1712, 1.442695
    %v1714 = vpow.pop %v1713
    %v1715 = vadd.f32 %v1714, 1.0
    %v1716 = vrcp.pop %v1715
    %v1717 = vmul.f32 1.0, %v1716
    %1719 = vrot.lane.b32.xlu0 %v1707, 64
    %v1720 = vpop.permute.xlu0 %1719
    %v1722 = vmul.f32 %v1717, %v1720
    %1724 = vrot.lane.b32.xlu0 %v1722, 64
    %v1725 = vpop.permute.xlu0 %1724
    %v1727 = vadd.f32 %v1634, %v1725
    %v1728 = vtanh.pop %v1727
    %v1729 = vsub.f32 1.0, %v1717
    %1731 = vrot.lane.b32.xlu0 %v1728, 96
    %v1732 = vpop.permute.xlu0 %1731
    %v1734 = vmul.f32 %v1729, %v1732
    %v1735 = vmul.f32 %v1717, %v1518
    %v1736 = vadd.f32 %v1734, %v1735
    %1738 = vrot.lane.b32.xlu0 %v1736, 96
    %v1739 = vpop.permute.xlu0 %1738
    %v1740 = vsel %vm213, %v1739, 0
    %1742 = vmatprep.subr.mxu0 0.0
    %1743 = vmatpush1.msra.mxu0 %v67
    %1744 = vmatprep.subr.mxu0 0.0
    %1745 = vmatpush1.msra.mxu0 %v68
    %1746 = vmatprep.subr.mxu0 0.0
    %1747 = vmatpush1.msra.mxu0 %v69
    %1748 = vmatprep.subr.mxu0 0.0
    %1749 = vmatpush1.msra.mxu0 %v70
    %1750 = vmatprep.subr.mxu0 0.0
    %1751 = vmatpush1.msra.mxu0 0.0
    %1752 = vmatprep.subr.mxu0 0.0
    %1753 = vmatpush1.msra.mxu0 0.0
    %1754 = vmatprep.subr.mxu0 0.0
    %1755 = vmatpush1.msra.mxu0 0.0
    %1756 = vmatprep.subr.mxu0 0.0
    %1757 = vmatpush1.msra.mxu0 0.0
    %1758 = vmatprep.subr.mxu0 0.0
    %1759 = vmatpush1.msra.mxu0 0.0
    %1760 = vmatprep.subr.mxu0 0.0
    %1761 = vmatpush1.msra.mxu0 0.0
    %1762 = vmatprep.subr.mxu0 0.0
    %1763 = vmatpush1.msra.mxu0 0.0
    %1764 = vmatprep.subr.mxu0 0.0
    %1765 = vmatpush1.msra.mxu0 0.0
    %1766 = vmatprep.subr.mxu0 0.0
    %1767 = vmatpush1.msra.mxu0 0.0
    %1768 = vmatprep.subr.mxu0 0.0
    %1769 = vmatpush1.msra.mxu0 0.0
    %1770 = vmatprep.subr.mxu0 0.0
    %1771 = vmatpush1.msra.mxu0 0.0
    %1772 = vmatprep.subr.mxu0 0.0
    %1773 = vmatpush1.msra.mxu0 0.0
    %1774 = vmatprep.subr.mxu0 0.0
    %1775 = vmatpush1.msra.mxu0 0.0
    %1776 = vmatprep.subr.mxu0 0.0
    %1777 = vmatpush1.msra.mxu0 0.0
    %1778 = vmatprep.subr.mxu0 0.0
    %1779 = vmatpush1.msra.mxu0 0.0
    %1780 = vmatprep.subr.mxu0 0.0
    %1781 = vmatpush1.msra.mxu0 0.0
    %1782 = vmatprep.subr.mxu0 0.0
    %1783 = vmatpush1.msra.mxu0 0.0
    %1784 = vmatprep.subr.mxu0 0.0
    %1785 = vmatpush1.msra.mxu0 0.0
    %1786 = vmatprep.subr.mxu0 0.0
    %1787 = vmatpush1.msra.mxu0 0.0
    %1788 = vmatprep.subr.mxu0 0.0
    %1789 = vmatpush1.msra.mxu0 0.0
    %1790 = vmatprep.subr.mxu0 0.0
    %1791 = vmatpush1.msra.mxu0 0.0
    %1792 = vmatprep.subr.mxu0 0.0
    %1793 = vmatpush1.msra.mxu0 0.0
    %1794 = vmatprep.subr.mxu0 0.0
    %1795 = vmatpush1.msra.mxu0 0.0
    %1796 = vmatprep.subr.mxu0 0.0
    %1797 = vmatpush1.msra.mxu0 0.0
    %1798 = vmatprep.subr.mxu0 0.0
    %1799 = vmatpush1.msra.mxu0 0.0
    %1800 = vmatprep.subr.mxu0 0.0
    %1801 = vmatpush1.msra.mxu0 0.0
    %1802 = vmatprep.subr.mxu0 0.0
    %1803 = vmatpush1.msra.mxu0 0.0
    %1804 = vmatprep.subr.mxu0 0.0
    %1805 = vmatpush1.msra.mxu0 0.0
    %1806 = vmatprep.mubr.f32.mxu0 0.0
    %1807 = vmatmul.mubr.f32.gmra.mrb[0].mxu0 %v1740
    %v1808 = vpop.f32.mrb[0].mxu0
    %v1809 = vadd.f32 %v208, %v1808
    %v1810 = vpop.f32.mrb[0].mxu0
    %1811 = vdwg.mxu0
    %1813 = vrot.lane.b32.xlu0 %v1707, 32
    %v1814 = vpop.permute.xlu0 %1813
    %1815 = vrot.lane.b32.xlu0 %v1709, 32
    %v1816 = vpop.permute.xlu0 %1815
    %v1817 = vsel %vm213, %v1814, %v1816
    %v1819 = vadd.f32 %v1809, %v1817
    %v1820 = vxor.u32 %v1819, 2147483648
    %v1821 = vmul.f32 %v1820, 1.442695
    %v1822 = vpow.pop %v1821
    %v1823 = vadd.f32 %v1822, 1.0
    %v1824 = vrcp.pop %v1823
    %v1825 = vmul.f32 1.0, %v1824
    %1826 = vrot.lane.b32.xlu0 %v1709, 96
    %v1827 = vpop.permute.xlu0 %1826
    %v1829 = vmul.f32 %v1825, %v1827
    %1831 = vrot.lane.b32.xlu0 %v1829, 64
    %v1832 = vpop.permute.xlu0 %1831
    %v1834 = vadd.f32 %v1809, %v1832
    %v1835 = vtanh.pop %v1834
    %v1836 = vsub.f32 1.0, %v1825
    %1838 = vrot.lane.b32.xlu0 %v1835, 96
    %v1839 = vpop.permute.xlu0 %1838
    %v1841 = vmul.f32 %v1836, %v1839
    %v1842 = vmul.f32 %v1825, %v1625
    %v1843 = vadd.f32 %v1841, %v1842
    %v1844 = vld [vmem:[%s7] sm:$0x1]
    %v1846 = vlaneseq
    %v1847 = vshrl.u32 %v1846, 7
    %v1848 = vsub.s32 0, %v1847
    %v1849 = vrot.slane %v1844, %v1848
    %1850 = vrot.lane.b32.xlu0 %v1849, 32
    %v1851 = vpop.permute.xlu0 %1850
    %v1853 = vmul.f32 %v1843, %v1851
    %1855 = vrot.lane.b32.xlu0 %v1853, 96
    %v1856 = vpop.permute.xlu0 %1855
    %vm1858 = vcmask 254976
    %v1859 = vsel %vm1858, %v1856, 0.0
    %1860 = vadd.xlane.f32.xlu0 %v1859
    %v1861 = vpop.xlane.xlu0 %1860
    %v1862 = vld [vmem:[#allocation2] sm:$0x1]
    %v1864 = vlaneseq
    %v1865 = vshrl.u32 %v1864, 7
    %v1866 = vsub.s32 0, %v1865
    %v1867 = vrot.slane %v1862, %v1866
    %v1869 = vadd.f32 %v1861, %v1867
    %vm1870 = vcmask 1024
    %1871 = vst.msk [vmem:[%s9] sm:$0x3] %vm1870, %v1869
    // Predicated region
    $region42: #{tpu_custom_call.1} parent=1 // pred_check
      _
    $region43: #{tpu_custom_call.1} parent=1 // pred_check_branch
      %1873 = sbr.rel (0) target = $region45
    $region44: #{tpu_custom_call.1} parent=1 // pred_region
      _
    $region45: #{tpu_custom_call.1} parent=1 // pred_fallthru
      _
    // Predicated region
    $region46: #{tpu_custom_call.1} parent=1 // pred_check
      _
    $region47: #{tpu_custom_call.1} parent=1 // pred_check_branch
      %1875 = sbr.rel (0) target = $region49
    $region48: #{tpu_custom_call.1} parent=1 // pred_region
      _
    $region49: #{tpu_custom_call.1} parent=1 // pred_fallthru
      _
    %1876 = vsyncpa [#allocation4], 1

</llo_original>
